<compile_context>
chip_gen: v7x
topology: tpu7x:2x2x1
jax: 0.10.0
libtpu: 0.0.40
codegen_flags: <defaults>
</compile_context>

<pallas_src>
import math
from functools import partial

import jax
import jax.numpy as jnp
from jax import lax
from jax.experimental import pallas as pl
from jax.experimental.pallas import tpu as pltpu


# ----------------------------- helpers -----------------------------

def _pick_tile(dim, preferred, align):
    """Largest tile <= preferred that divides dim and is a multiple of align,
    falling back to the full dimension (always legal for BlockSpec)."""
    if dim <= preferred:
        return dim
    t = (preferred // align) * align
    while t >= align:
        if dim % t == 0:
            return t
        t -= align
    return dim


def _mosaic(semantics, vmem_bytes):
    """CompilerParams with an explicit (floored) scoped-VMEM budget."""
    return pltpu.CompilerParams(
        dimension_semantics=semantics,
        vmem_limit_bytes=int(max(vmem_bytes, 32 * 1024 * 1024)))


# ----------------------------- Pallas kernels -----------------------------

def _linear_kernel(x_ref, w_ref, b_ref, o_ref, acc_ref, *, activation):
    """Tiled Y = X @ W + b (optionally GELU) with f32 accumulator over K."""
    @pl.when(pl.program_id(2) == 0)
    def _():
        acc_ref[...] = jnp.zeros_like(acc_ref)

    acc_ref[...] += jnp.dot(x_ref[...], w_ref[...],
                            preferred_element_type=jnp.float32)

    @pl.when(pl.program_id(2) == pl.num_programs(2) - 1)
    def _():
        y = acc_ref[...] + b_ref[...]
        if activation == "gelu":
            # tanh-approx GELU (BERT-style), computed in f32.
            y = 0.5 * y * (1.0 + jnp.tanh(0.7978845608028654 *
                                          (y + 0.044715 * y * y * y)))
        o_ref[...] = y.astype(o_ref.dtype)


def _linear_add_ln_kernel(x_ref, w_ref, b_ref, r_ref, g_ref, be_ref,
                          o_ref, acc_ref, *, eps):
    """Y = LayerNorm(X @ W + b + residual), LN fused into the K finalize.

    Requires tn == full feature dim so the LN reduction sees the whole row.
    """
    @pl.when(pl.program_id(1) == 0)
    def _():
        acc_ref[...] = jnp.zeros_like(acc_ref)

    acc_ref[...] += jnp.dot(x_ref[...], w_ref[...],
                            preferred_element_type=jnp.float32)

    @pl.when(pl.program_id(1) == pl.num_programs(1) - 1)
    def _():
        y = acc_ref[...] + b_ref[...] + r_ref[...].astype(jnp.float32)
        mu = jnp.mean(y, axis=-1, keepdims=True)
        yc = y - mu
        var = jnp.mean(yc * yc, axis=-1, keepdims=True)
        out = yc * lax.rsqrt(var + eps) * g_ref[...] + be_ref[...]
        o_ref[...] = out.astype(o_ref.dtype)


def _attn_kernel(qkv_ref, m_ref, o_ref, *, hpg, dh, tq):
    """Scaled-dot-product attention for one (batch, head-group, query-tile).

    qkv_ref block: (1, S, 3*hpg*dh) packed [Q_g | K_g | V_g] for the head
                   group (columns pre-permuted at init), bf16.
    m_ref   block: (1, 1, S) additive key mask, f32.
    o_ref   block: (1, tq, hpg*dh) output rows [qi*tq : (qi+1)*tq], bf16.
    """
    row0 = pl.multiple_of(pl.program_id(2) * tq, tq)
    mask = m_ref[0]                                          # (1, S) f32
    outs = []
    # TODO(synk): flash-style key tiling (online softmax) for very long S.
    for h in range(hpg):
        # Ref-level slices: only the needed columns/rows are loaded.
        q = qkv_ref[0, pl.ds(row0, tq), pl.ds(h * dh, dh)]           # (tq, dh)
        k = qkv_ref[0, :, pl.ds((hpg + h) * dh, dh)]                 # (S,  dh)
        v = qkv_ref[0, :, pl.ds((2 * hpg + h) * dh, dh)]             # (S,  dh)
        # q @ k.T without materializing a transposed K.
        s = lax.dot_general(q, k, (((1,), (1,)), ((), ())),
                            preferred_element_type=jnp.float32)      # (tq, S)
        s = s + mask          # 1/sqrt(dh) already folded into Q weights
        s = s - jnp.max(s, axis=-1, keepdims=True)
        p = jnp.exp(s)
        p = p / jnp.sum(p, axis=-1, keepdims=True)                   # exact
        outs.append(jnp.dot(p.astype(v.dtype), v,
                            preferred_element_type=jnp.float32))     # (tq, dh)
    out = outs[0] if hpg == 1 else jnp.concatenate(outs, axis=-1)
    o_ref[0] = out.astype(o_ref.dtype)        # single lane-dense pair store


def _ln_kernel(x_ref, g_ref, b_ref, o_ref, *, eps):
    """LayerNorm(x) over the last axis (f32 math)."""
    x = x_ref[...].astype(jnp.float32)
    mu = jnp.mean(x, axis=-1, keepdims=True)
    xc = x - mu
    var = jnp.mean(xc * xc, axis=-1, keepdims=True)
    y = xc * lax.rsqrt(var + eps)
    o_ref[...] = (y * g_ref[...] + b_ref[...]).astype(o_ref.dtype)


# ----------------------------- Pallas wrappers -----------------------------

def pallas_linear(x, w, b, activation=None, out_dtype=jnp.bfloat16,
                  tm_pref=512, tn_pref=1024, tk_pref=512):
    m, k = x.shape
    _, n = w.shape
    tm = _pick_tile(m, tm_pref, 16)      # sublane-aligned for bf16
    tn = _pick_tile(n, tn_pref, 128)     # lane-aligned
    tk = _pick_tile(k, tk_pref, 128)
    # double-buffered bf16 in/out tiles + f32 accumulator + bias
    vmem = (2 * (tm * tk + tk * tn) * 2 + 2 * tm * tn * 2
            + tm * tn * 4 + 2 * tn * 4)
    return pl.pallas_call(
        partial(_linear_kernel, activation=activation),
        out_shape=jax.ShapeDtypeStruct((m, n), out_dtype),
        grid=(m // tm, n // tn, k // tk),
        in_specs=[
            pl.BlockSpec((tm, tk), lambda i, j, kk: (i, kk)),
            pl.BlockSpec((tk, tn), lambda i, j, kk: (kk, j)),
            pl.BlockSpec((1, tn), lambda i, j, kk: (0, j)),
        ],
        out_specs=pl.BlockSpec((tm, tn), lambda i, j, kk: (i, j)),
        scratch_shapes=[pltpu.VMEM((tm, tn), jnp.float32)],
        compiler_params=_mosaic(("parallel", "parallel", "arbitrary"),
                                2 * vmem),
    )(x, w, b)


def pallas_linear_add_layernorm(x, w, b, res, gamma, beta, eps=1e-12,
                                out_dtype=jnp.bfloat16,
                                tm_pref=512, tk_pref=512):
    """LayerNorm(x @ w + b + res): the add+LN is fused into the matmul
    epilogue (tn forced to the full output width)."""
    m, k = x.shape
    _, n = w.shape
    tm = _pick_tile(m, tm_pref, 16)
    tk = _pick_tile(k, tk_pref, 128)
    vmem = (2 * (tm * tk + tk * n) * 2 + 2 * tm * n * 2 + 2 * tm * n * 2
            + tm * n * 4 + 3 * n * 4)
    return pl.pallas_call(
        partial(_linear_add_ln_kernel, eps=eps),
        out_shape=jax.ShapeDtypeStruct((m, n), out_dtype),
        grid=(m // tm, k // tk),
        in_specs=[
            pl.BlockSpec((tm, tk), lambda i, kk: (i, kk)),
            pl.BlockSpec((tk, n), lambda i, kk: (kk, 0)),
            pl.BlockSpec((1, n), lambda i, kk: (0, 0)),
            pl.BlockSpec((tm, n), lambda i, kk: (i, 0)),   # residual (resident)
            pl.BlockSpec((1, n), lambda i, kk: (0, 0)),
            pl.BlockSpec((1, n), lambda i, kk: (0, 0)),
        ],
        out_specs=pl.BlockSpec((tm, n), lambda i, kk: (i, 0)),
        scratch_shapes=[pltpu.VMEM((tm, n), jnp.float32)],
        compiler_params=_mosaic(("parallel", "arbitrary"), 2 * vmem),
    )(x, w, b, res, gamma, beta)


def pallas_attention(qkv, mask_add, *, heads, hidden, tq_pref=256):
    """qkv: (B, S, 3D) packed projections in head-group-contiguous column
    layout; mask_add: (B, 1, S) additive key mask."""
    b, s, _ = qkv.shape
    dh = hidden // heads
    hpg = 2 if heads % 2 == 0 else 1          # heads per group (lane-dense pairs)
    n_groups = heads // hpg
    tq = _pick_tile(s, tq_pref, 8)
    blk = 3 * hpg * dh
    vmem = (2 * s * blk * 2 + 2 * s * 4 + 2 * tq * hpg * dh * 2
            + hpg * (tq * s * 4 + tq * dh * 4))
    return pl.pallas_call(
        partial(_attn_kernel, hpg=hpg, dh=dh, tq=tq),
        out_shape=jax.ShapeDtypeStruct((b, s, hidden), qkv.dtype),
        grid=(b, n_groups, s // tq),
        in_specs=[
            pl.BlockSpec((1, s, blk), lambda bi, gi, qi: (bi, 0, gi)),
            pl.BlockSpec((1, 1, s), lambda bi, gi, qi: (bi, 0, 0)),
        ],
        out_specs=pl.BlockSpec((1, tq, hpg * dh),
                               lambda bi, gi, qi: (bi, qi, gi)),
        compiler_params=_mosaic(("parallel", "parallel", "arbitrary"),
                                2 * vmem),
    )(qkv, mask_add)


def pallas_layernorm(x, gamma, beta, eps=1e-12, out_dtype=jnp.bfloat16,
                     tm_pref=1024):
    n, d = x.shape
    tm = _pick_tile(n, tm_pref, 16)
    vmem = 2 * tm * d * 4 + 2 * tm * d * 2 + 2 * d * 4
    return pl.pallas_call(
        partial(_ln_kernel, eps=eps),
        out_shape=jax.ShapeDtypeStruct((n, d), out_dtype),
        grid=(n // tm,),
        in_specs=[
            pl.BlockSpec((tm, d), lambda i: (i, 0)),
            pl.BlockSpec((1, d), lambda i: (0, 0)),
            pl.BlockSpec((1, d), lambda i: (0, 0)),
        ],
        out_specs=pl.BlockSpec((tm, d), lambda i: (i, 0)),
        compiler_params=_mosaic(("parallel",), 2 * vmem),
    )(x, gamma, beta)


# ----------------------------- Parameter init -----------------------------

def _qkv_col_perm(hidden, heads, hpg):
    """Column permutation mapping natural [Q|K|V] (D each) into per-head-group
    contiguous blocks [Q_g | K_g | V_g] of width 3*hpg*dh."""
    dh = hidden // heads
    idx = []
    for g in range(heads // hpg):
        for blk in range(3):               # Q, K, V
            for j in range(hpg):
                h = g * hpg + j
                start = blk * hidden + h * dh
                idx.extend(range(start, start + dh))
    return jnp.asarray(idx, dtype=jnp.int32)


def init_params(key, *, vocab, max_pos, hidden, heads, ffn, layers):
    dh = hidden // heads
    hpg = 2 if heads % 2 == 0 else 1
    q_scale = 1.0 / math.sqrt(dh)
    perm = _qkv_col_perm(hidden, heads, hpg)

    ks = iter(jax.random.split(key, 8 + layers * 8))
    std = 0.02

    def nrm32(shape):
        return jax.random.normal(next(ks), shape, jnp.float32) * std

    params = {
        "word_emb": nrm32((vocab, hidden)),
        "pos_emb": nrm32((max_pos, hidden)),
        "type_emb": nrm32((2, hidden)),
        "emb_ln_g": jnp.ones((1, hidden), jnp.float32),
        "emb_ln_b": jnp.zeros((1, hidden), jnp.float32),
        "layers": [],
    }
    for _ in range(layers):
        wq = nrm32((hidden, hidden))
        wk = nrm32((hidden, hidden))
        wv = nrm32((hidden, hidden))
        # 1/sqrt(dh) folded into the Q columns; columns permuted so each head
        # group's [Q|K|V] is contiguous (lane-dense attention blocks).
        wqkv = jnp.concatenate([wq * q_scale, wk, wv], axis=1)[:, perm]
        params["layers"].append({
            "wqkv": wqkv.astype(jnp.bfloat16),
            "bqkv": jnp.zeros((1, 3 * hidden), jnp.float32),  # zeros: perm no-op
            "wo": nrm32((hidden, hidden)).astype(jnp.bfloat16),
            "bo": jnp.zeros((1, hidden), jnp.float32),
            "ln1_g": jnp.ones((1, hidden), jnp.float32),
            "ln1_b": jnp.zeros((1, hidden), jnp.float32),
            "w1": nrm32((hidden, ffn)).astype(jnp.bfloat16),
            "b1": jnp.zeros((1, ffn), jnp.float32),
            "w2": nrm32((ffn, hidden)).astype(jnp.bfloat16),
            "b2": jnp.zeros((1, hidden), jnp.float32),
            "ln2_g": jnp.ones((1, hidden), jnp.float32),
            "ln2_b": jnp.zeros((1, hidden), jnp.float32),
        })
    return params


# ----------------------------- Forward pass -----------------------------

def text_encoder_forward(params, input_ids, attention_mask, *, hidden, heads):
    B, S = input_ids.shape
    D = hidden

    # TODO(synk): embedding-table gather stays in plain JAX (glue);
    # a DMA-gather Pallas kernel is not worth it at these sizes.
    x = (params["word_emb"][input_ids]
         + params["pos_emb"][None, :S, :]
         + params["type_emb"][0][None, None, :])                    # (B, S, D)
    x2 = pallas_layernorm(x.reshape(B * S, D),
                          params["emb_ln_g"], params["emb_ln_b"])   # (B*S, D) bf16

    # Additive attention mask over keys: 0 where attended, -1e9 where masked.
    mask_add = ((1.0 - attention_mask.astype(jnp.float32)) * -1e9)[:, None, :]

    for layer in params["layers"]:
        # Fused QKV projection (one MXU pass), columns in head-group layout.
        qkv = pallas_linear(x2, layer["wqkv"], layer["bqkv"])        # (B*S, 3D)
        ctx = pallas_attention(qkv.reshape(B, S, 3 * D), mask_add,
                               heads=heads, hidden=D)                # (B, S, D)
        # wo matmul with residual-add + post-LN fused into its epilogue.
        x2 = pallas_linear_add_layernorm(ctx.reshape(B * S, D),
                                         layer["wo"], layer["bo"], x2,
                                         layer["ln1_g"], layer["ln1_b"])
        # Feed-forward; w2 matmul also fuses residual-add + post-LN.
        h = pallas_linear(x2, layer["w1"], layer["b1"], activation="gelu")
        x2 = pallas_linear_add_layernorm(h, layer["w2"], layer["b2"], x2,
                                         layer["ln2_g"], layer["ln2_b"])

    last_hidden_state = x2.astype(jnp.float32).reshape(B, S, D)
    cls_embedding = last_hidden_state[:, 0]                          # (B, D)
    return cls_embedding, last_hidden_state


# ----------------------------- Main -----------------------------

if __name__ == "__main__":
    # Small, deterministic config (stands in for the pretrained encoder).
    VOCAB, MAX_POS = 100, 16
    HIDDEN, HEADS, FFN, LAYERS = 32, 2, 64, 2
    B, S = 2, 8

    key = jax.random.PRNGKey(0)
    k_ids, k_params = jax.random.split(key)

    params = init_params(k_params, vocab=VOCAB, max_pos=MAX_POS,
                         hidden=HIDDEN, heads=HEADS, ffn=FFN, layers=LAYERS)

    input_ids = jax.random.randint(k_ids, (B, S), 0, VOCAB, dtype=jnp.int32)
    attention_mask = jnp.ones((B, S), dtype=jnp.int32)
    attention_mask = attention_mask.at[1, 6:].set(0)   # pad tail of second sequence

    fwd = jax.jit(partial(text_encoder_forward, hidden=HIDDEN, heads=HEADS))
    cls_embedding, last_hidden_state = fwd(params, input_ids, attention_mask)
    jax.block_until_ready((cls_embedding, last_hidden_state))

    assert cls_embedding.shape == (B, HIDDEN)
    assert last_hidden_state.shape == (B, S, HIDDEN)
    assert bool(jnp.all(jnp.isfinite(cls_embedding)))
    assert bool(jnp.all(jnp.isfinite(last_hidden_state)))
    print("KERNEL_OK")
</pallas_src>

<mosaic_0001>
module attributes {stable_mosaic.version = 11 : i64} {
  func.func @_linear_kernel(%arg0: i32, %arg1: i32, %arg2: i32, %arg3: memref<16x32xbf16, #tpu.memory_space<vmem>>, %arg4: memref<32x96xbf16, #tpu.memory_space<vmem>>, %arg5: memref<1x96xf32, #tpu.memory_space<vmem>>, %arg6: memref<16x96xbf16, #tpu.memory_space<vmem>>, %arg7: memref<16x96xf32, #tpu.memory_space<vmem>>) attributes {dimension_semantics = [#tpu.dimension_semantics<parallel>, #tpu.dimension_semantics<parallel>, #tpu.dimension_semantics<arbitrary>], iteration_bounds = array<i64: 1, 1, 1>, scalar_prefetch = 0 : i64, scratch_operands = 1 : i64, tpu.core_type = #tpu.core_type<tc>, window_params = [{transform_indices = @transform_0, window_bounds = array<i64: 16, 32>}, {transform_indices = @transform_1, window_bounds = array<i64: 32, 96>}, {transform_indices = @transform_2, window_bounds = array<i64: 1, 96>}, {transform_indices = @transform_3, window_bounds = array<i64: 16, 96>}]} {
    %c0_i32 = arith.constant 0 : i32
    %0 = arith.cmpi eq, %arg2, %c0_i32 : i32
    %1 = arith.extui %0 : i1 to i32
    %c0_i32_0 = arith.constant 0 : i32
    %2 = arith.cmpi ne, %1, %c0_i32_0 : i32
    scf.if %2 {
      %cst_10 = arith.constant 0.000000e+00 : f32
      %12 = vector.broadcast %cst_10 : f32 to vector<16x96xf32>
      %c0_11 = arith.constant 0 : index
      %c0_12 = arith.constant 0 : index
      %13 = vector.load %arg7[%c0_11, %c0_12] : memref<16x96xf32, #tpu.memory_space<vmem>>, vector<16x96xf32>
      tpu.vector_store %arg7[%c0_11, %c0_12], %12 {strides = array<i32>} : memref<16x96xf32, #tpu.memory_space<vmem>>, vector<16x96xf32>,
    } else {
    }
    %c0 = arith.constant 0 : index
    %c0_1 = arith.constant 0 : index
    %3 = vector.load %arg7[%c0, %c0_1] : memref<16x96xf32, #tpu.memory_space<vmem>>, vector<16x96xf32>
    %c0_2 = arith.constant 0 : index
    %c0_3 = arith.constant 0 : index
    %4 = vector.load %arg3[%c0_2, %c0_3] : memref<16x32xbf16, #tpu.memory_space<vmem>>, vector<16x32xbf16>
    %c0_4 = arith.constant 0 : index
    %c0_5 = arith.constant 0 : index
    %5 = vector.load %arg4[%c0_4, %c0_5] : memref<32x96xbf16, #tpu.memory_space<vmem>>, vector<32x96xbf16>
    %cst = arith.constant dense<0.000000e+00> : vector<16x96xf32>
    %6 = tpu.matmul %4, %5, %cst {dimension_numbers = #tpu.dot_dimension_numbers<[1], [0], [0], [1], [0, 0, 1, 1], [], []>} : vector<16x32xbf16>, vector<32x96xbf16>, vector<16x96xf32> -> vector<16x96xf32>
    %7 = arith.addf %3, %6 : vector<16x96xf32>
    %c0_6 = arith.constant 0 : index
    %c0_7 = arith.constant 0 : index
    %8 = vector.load %arg7[%c0_6, %c0_7] : memref<16x96xf32, #tpu.memory_space<vmem>>, vector<16x96xf32>
    tpu.vector_store %arg7[%c0_6, %c0_7], %7 {strides = array<i32>} : memref<16x96xf32, #tpu.memory_space<vmem>>, vector<16x96xf32>,
    %c0_i32_8 = arith.constant 0 : i32
    %9 = arith.cmpi eq, %arg2, %c0_i32_8 : i32
    %10 = arith.extui %9 : i1 to i32
    %c0_i32_9 = arith.constant 0 : i32
    %11 = arith.cmpi ne, %10, %c0_i32_9 : i32
    scf.if %11 {
      %c0_10 = arith.constant 0 : index
      %c0_11 = arith.constant 0 : index
      %12 = vector.load %arg7[%c0_10, %c0_11] : memref<16x96xf32, #tpu.memory_space<vmem>>, vector<16x96xf32>
      %c0_12 = arith.constant 0 : index
      %c0_13 = arith.constant 0 : index
      %13 = vector.load %arg5[%c0_12, %c0_13] : memref<1x96xf32, #tpu.memory_space<vmem>>, vector<1x96xf32>
      %14 = vector.broadcast %13 : vector<1x96xf32> to vector<16x96xf32>
      %15 = arith.addf %12, %14 : vector<16x96xf32>
      %16 = arith.truncf %15 : vector<16x96xf32> to vector<16x96xbf16>
      %c0_14 = arith.constant 0 : index
      %c0_15 = arith.constant 0 : index
      %17 = vector.load %arg6[%c0_14, %c0_15] : memref<16x96xbf16, #tpu.memory_space<vmem>>, vector<16x96xbf16>
      tpu.vector_store %arg6[%c0_14, %c0_15], %16 {strides = array<i32>} : memref<16x96xbf16, #tpu.memory_space<vmem>>, vector<16x96xbf16>,
    } else {
    }
    return
  }
  func.func @transform_0(%arg0: i32, %arg1: i32, %arg2: i32) -> (i32, i32) {
    %c0_i32 = arith.constant 0 : i32
    return %arg0, %arg2 : i32, i32
  }
  func.func @transform_1(%arg0: i32, %arg1: i32, %arg2: i32) -> (i32, i32) {
    %c0_i32 = arith.constant 0 : i32
    return %arg2, %arg1 : i32, i32
  }
  func.func @transform_2(%arg0: i32, %arg1: i32, %arg2: i32) -> (i32, i32) {
    %c0_i32 = arith.constant 0 : i32
    %c0_i32_0 = arith.constant 0 : i32
    return %c0_i32, %arg1 : i32, i32
  }
  func.func @transform_3(%arg0: i32, %arg1: i32, %arg2: i32) -> (i32, i32) {
    %c0_i32 = arith.constant 0 : i32
    return %arg0, %arg1 : i32, i32
  }
}

module attributes {stable_mosaic.version = 11 : i64} {
  func.func @_ln_kernel(%arg0: i32, %arg1: memref<16x32xf32, #tpu.memory_space<vmem>>, %arg2: memref<1x32xf32, #tpu.memory_space<vmem>>, %arg3: memref<1x32xf32, #tpu.memory_space<vmem>>, %arg4: memref<16x32xbf16, #tpu.memory_space<vmem>>) attributes {dimension_semantics = [#tpu.dimension_semantics<parallel>], iteration_bounds = array<i64: 1>, scalar_prefetch = 0 : i64, scratch_operands = 0 : i64, tpu.core_type = #tpu.core_type<tc>, window_params = [{transform_indices = @transform_0, window_bounds = array<i64: 16, 32>}, {pipeline_mode = #tpu.pipeline_mode<synchronous>, transform_indices = @transform_1, window_bounds = array<i64: 1, 32>}, {pipeline_mode = #tpu.pipeline_mode<synchronous>, transform_indices = @transform_2, window_bounds = array<i64: 1, 32>}, {transform_indices = @transform_3, window_bounds = array<i64: 16, 32>}]} {
    %c0 = arith.constant 0 : index
    %c0_0 = arith.constant 0 : index
    %0 = vector.load %arg1[%c0, %c0_0] : memref<16x32xf32, #tpu.memory_space<vmem>>, vector<16x32xf32>
    %cst = arith.constant dense<0.000000e+00> : vector<16xf32>
    %1 = vector.multi_reduction <add>, %0, %cst [1] : vector<16x32xf32> to vector<16xf32>
    %2 = vector.shape_cast %1 : vector<16xf32> to vector<16x1xf32>
    %cst_1 = arith.constant 3.200000e+01 : f32
    %3 = vector.broadcast %cst_1 : f32 to vector<16x1xf32>
    %4 = arith.divf %2, %3 : vector<16x1xf32>
    %5 = vector.broadcast %4 : vector<16x1xf32> to vector<16x32xf32>
    %6 = arith.subf %0, %5 : vector<16x32xf32>
    %7 = arith.mulf %6, %6 : vector<16x32xf32>
    %cst_2 = arith.constant dense<0.000000e+00> : vector<16xf32>
    %8 = vector.multi_reduction <add>, %7, %cst_2 [1] : vector<16x32xf32> to vector<16xf32>
    %9 = vector.shape_cast %8 : vector<16xf32> to vector<16x1xf32>
    %cst_3 = arith.constant 3.200000e+01 : f32
    %10 = vector.broadcast %cst_3 : f32 to vector<16x1xf32>
    %11 = arith.divf %9, %10 : vector<16x1xf32>
    %cst_4 = arith.constant 9.99999996E-13 : f32
    %12 = vector.broadcast %cst_4 : f32 to vector<16x1xf32>
    %13 = arith.addf %11, %12 : vector<16x1xf32>
    %14 = math.rsqrt %13 : vector<16x1xf32>
    %15 = vector.broadcast %14 : vector<16x1xf32> to vector<16x32xf32>
    %16 = arith.mulf %6, %15 : vector<16x32xf32>
    %c0_5 = arith.constant 0 : index
    %c0_6 = arith.constant 0 : index
    %17 = vector.load %arg2[%c0_5, %c0_6] : memref<1x32xf32, #tpu.memory_space<vmem>>, vector<1x32xf32>
    %18 = vector.broadcast %17 : vector<1x32xf32> to vector<16x32xf32>
    %19 = arith.mulf %16, %18 : vector<16x32xf32>
    %c0_7 = arith.constant 0 : index
    %c0_8 = arith.constant 0 : index
    %20 = vector.load %arg3[%c0_7, %c0_8] : memref<1x32xf32, #tpu.memory_space<vmem>>, vector<1x32xf32>
    %21 = vector.broadcast %20 : vector<1x32xf32> to vector<16x32xf32>
    %22 = arith.addf %19, %21 : vector<16x32xf32>
    %23 = arith.truncf %22 : vector<16x32xf32> to vector<16x32xbf16>
    %c0_9 = arith.constant 0 : index
    %c0_10 = arith.constant 0 : index
    %24 = vector.load %arg4[%c0_9, %c0_10] : memref<16x32xbf16, #tpu.memory_space<vmem>>, vector<16x32xbf16>
    tpu.vector_store %arg4[%c0_9, %c0_10], %23 {strides = array<i32>} : memref<16x32xbf16, #tpu.memory_space<vmem>>, vector<16x32xbf16>,
    return
  }
  func.func @transform_0(%arg0: i32) -> (i32, i32) {
    %c0_i32 = arith.constant 0 : i32
    %c0_i32_0 = arith.constant 0 : i32
    return %arg0, %c0_i32 : i32, i32
  }
  func.func @transform_1(%arg0: i32) -> (i32, i32) {
    %c0_i32 = arith.constant 0 : i32
    %c0_i32_0 = arith.constant 0 : i32
    %c0_i32_1 = arith.constant 0 : i32
    return %c0_i32, %c0_i32_0 : i32, i32
  }
  func.func @transform_2(%arg0: i32) -> (i32, i32) {
    %c0_i32 = arith.constant 0 : i32
    %c0_i32_0 = arith.constant 0 : i32
    %c0_i32_1 = arith.constant 0 : i32
    return %c0_i32, %c0_i32_0 : i32, i32
  }
  func.func @transform_3(%arg0: i32) -> (i32, i32) {
    %c0_i32 = arith.constant 0 : i32
    %c0_i32_0 = arith.constant 0 : i32
    return %arg0, %c0_i32 : i32, i32
  }
}

module attributes {stable_mosaic.version = 11 : i64} {
  func.func @_attn_kernel(%arg0: i32, %arg1: i32, %arg2: i32, %arg3: memref<1x8x96xbf16, #tpu.memory_space<vmem>>, %arg4: memref<1x1x8xf32, #tpu.memory_space<vmem>>, %arg5: memref<1x8x32xbf16, #tpu.memory_space<vmem>>) attributes {dimension_semantics = [#tpu.dimension_semantics<parallel>, #tpu.dimension_semantics<parallel>, #tpu.dimension_semantics<arbitrary>], iteration_bounds = array<i64: 2, 1, 1>, scalar_prefetch = 0 : i64, scratch_operands = 0 : i64, tpu.core_type = #tpu.core_type<tc>, window_params = [{transform_indices = @transform_0, window_bounds = array<i64: 1, 8, 96>}, {transform_indices = @transform_1, window_bounds = array<i64: 1, 1, 8>}, {transform_indices = @transform_2, window_bounds = array<i64: 1, 8, 32>}]} {
    %c8_i32 = arith.constant 8 : i32
    %0 = arith.muli %arg2, %c8_i32 : i32
    %1 = tpu.assume_multiple %0, 8 : i32
    %c0 = arith.constant 0 : index
    %c0_0 = arith.constant 0 : index
    %c0_1 = arith.constant 0 : index
    %2 = vector.load %arg4[%c0, %c0_0, %c0_1] : memref<1x1x8xf32, #tpu.memory_space<vmem>>, vector<1x1x8xf32>
    %3 = vector.shape_cast %2 : vector<1x1x8xf32> to vector<1x8xf32>
    %c0_2 = arith.constant 0 : index
    %4 = arith.index_cast %1 : i32 to index
    %c0_3 = arith.constant 0 : index
    %5 = vector.load %arg3[%c0_2, %4, %c0_3] : memref<1x8x96xbf16, #tpu.memory_space<vmem>>, vector<1x8x16xbf16>
    %6 = vector.shape_cast %5 : vector<1x8x16xbf16> to vector<8x16xbf16>
    %c0_4 = arith.constant 0 : index
    %c0_5 = arith.constant 0 : index
    %c32 = arith.constant 32 : index
    %7 = vector.load %arg3[%c0_4, %c0_5, %c32] : memref<1x8x96xbf16, #tpu.memory_space<vmem>>, vector<1x8x16xbf16>
    %8 = vector.shape_cast %7 : vector<1x8x16xbf16> to vector<8x16xbf16>
    %c0_6 = arith.constant 0 : index
    %c0_7 = arith.constant 0 : index
    %c64 = arith.constant 64 : index
    %9 = vector.load %arg3[%c0_6, %c0_7, %c64] : memref<1x8x96xbf16, #tpu.memory_space<vmem>>, vector<1x8x16xbf16>
    %10 = vector.shape_cast %9 : vector<1x8x16xbf16> to vector<8x16xbf16>
    %cst = arith.constant dense<0.000000e+00> : vector<8x8xf32>
    %11 = tpu.matmul %6, %8, %cst {dimension_numbers = #tpu.dot_dimension_numbers<[1], [1], [0], [0], [0, 0, 1, 0], [], []>} : vector<8x16xbf16>, vector<8x16xbf16>, vector<8x8xf32> -> vector<8x8xf32>
    %12 = vector.broadcast %3 : vector<1x8xf32> to vector<8x8xf32>
    %13 = arith.addf %11, %12 : vector<8x8xf32>
    %cst_8 = arith.constant dense<0xFF800000> : vector<8xf32>
    %14 = vector.multi_reduction <maximumf>, %13, %cst_8 [1] : vector<8x8xf32> to vector<8xf32>
    %15 = vector.shape_cast %14 : vector<8xf32> to vector<8x1xf32>
    %16 = vector.broadcast %15 : vector<8x1xf32> to vector<8x8xf32>
    %17 = arith.subf %13, %16 : vector<8x8xf32>
    %18 = math.exp %17 : vector<8x8xf32>
    %cst_9 = arith.constant dense<0.000000e+00> : vector<8xf32>
    %19 = vector.multi_reduction <add>, %18, %cst_9 [1] : vector<8x8xf32> to vector<8xf32>
    %20 = vector.shape_cast %19 : vector<8xf32> to vector<8x1xf32>
    %21 = vector.broadcast %20 : vector<8x1xf32> to vector<8x8xf32>
    %22 = arith.divf %18, %21 : vector<8x8xf32>
    %23 = arith.truncf %22 : vector<8x8xf32> to vector<8x8xbf16>
    %cst_10 = arith.constant dense<0.000000e+00> : vector<8x16xf32>
    %24 = tpu.matmul %23, %10, %cst_10 {dimension_numbers = #tpu.dot_dimension_numbers<[1], [0], [0], [1], [0, 0, 1, 1], [], []>} : vector<8x8xbf16>, vector<8x16xbf16>, vector<8x16xf32> -> vector<8x16xf32>
    %c0_11 = arith.constant 0 : index
    %25 = arith.index_cast %1 : i32 to index
    %c16 = arith.constant 16 : index
    %26 = vector.load %arg3[%c0_11, %25, %c16] : memref<1x8x96xbf16, #tpu.memory_space<vmem>>, vector<1x8x16xbf16>
    %27 = vector.shape_cast %26 : vector<1x8x16xbf16> to vector<8x16xbf16>
    %c0_12 = arith.constant 0 : index
    %c0_13 = arith.constant 0 : index
    %c48 = arith.constant 48 : index
    %28 = vector.load %arg3[%c0_12, %c0_13, %c48] : memref<1x8x96xbf16, #tpu.memory_space<vmem>>, vector<1x8x16xbf16>
    %29 = vector.shape_cast %28 : vector<1x8x16xbf16> to vector<8x16xbf16>
    %c0_14 = arith.constant 0 : index
    %c0_15 = arith.constant 0 : index
    %c80 = arith.constant 80 : index
    %30 = vector.load %arg3[%c0_14, %c0_15, %c80] : memref<1x8x96xbf16, #tpu.memory_space<vmem>>, vector<1x8x16xbf16>
    %31 = vector.shape_cast %30 : vector<1x8x16xbf16> to vector<8x16xbf16>
    %cst_16 = arith.constant dense<0.000000e+00> : vector<8x8xf32>
    %32 = tpu.matmul %27, %29, %cst_16 {dimension_numbers = #tpu.dot_dimension_numbers<[1], [1], [0], [0], [0, 0, 1, 0], [], []>} : vector<8x16xbf16>, vector<8x16xbf16>, vector<8x8xf32> -> vector<8x8xf32>
    %33 = vector.broadcast %3 : vector<1x8xf32> to vector<8x8xf32>
    %34 = arith.addf %32, %33 : vector<8x8xf32>
    %cst_17 = arith.constant dense<0xFF800000> : vector<8xf32>
    %35 = vector.multi_reduction <maximumf>, %34, %cst_17 [1] : vector<8x8xf32> to vector<8xf32>
    %36 = vector.shape_cast %35 : vector<8xf32> to vector<8x1xf32>
    %37 = vector.broadcast %36 : vector<8x1xf32> to vector<8x8xf32>
    %38 = arith.subf %34, %37 : vector<8x8xf32>
    %39 = math.exp %38 : vector<8x8xf32>
    %cst_18 = arith.constant dense<0.000000e+00> : vector<8xf32>
    %40 = vector.multi_reduction <add>, %39, %cst_18 [1] : vector<8x8xf32> to vector<8xf32>
    %41 = vector.shape_cast %40 : vector<8xf32> to vector<8x1xf32>
    %42 = vector.broadcast %41 : vector<8x1xf32> to vector<8x8xf32>
    %43 = arith.divf %39, %42 : vector<8x8xf32>
    %44 = arith.truncf %43 : vector<8x8xf32> to vector<8x8xbf16>
    %cst_19 = arith.constant dense<0.000000e+00> : vector<8x16xf32>
    %45 = tpu.matmul %44, %31, %cst_19 {dimension_numbers = #tpu.dot_dimension_numbers<[1], [0], [0], [1], [0, 0, 1, 1], [], []>} : vector<8x8xbf16>, vector<8x16xbf16>, vector<8x16xf32> -> vector<8x16xf32>
    %46 = tpu.concatenate %24, %45 in 1 : vector<8x16xf32>, vector<8x16xf32> -> vector<8x32xf32>
    %47 = arith.truncf %46 : vector<8x32xf32> to vector<8x32xbf16>
    %c0_20 = arith.constant 0 : index
    %c0_21 = arith.constant 0 : index
    %c0_22 = arith.constant 0 : index
    %48 = vector.load %arg5[%c0_20, %c0_21, %c0_22] : memref<1x8x32xbf16, #tpu.memory_space<vmem>>, vector<1x8x32xbf16>
    %49 = vector.shape_cast %48 : vector<1x8x32xbf16> to vector<8x32xbf16>
    %50 = vector.shape_cast %47 : vector<8x32xbf16> to vector<1x8x32xbf16>
    tpu.vector_store %arg5[%c0_20, %c0_21, %c0_22], %50 {strides = array<i32>} : memref<1x8x32xbf16, #tpu.memory_space<vmem>>, vector<1x8x32xbf16>,
    return
  }
  func.func @transform_0(%arg0: i32, %arg1: i32, %arg2: i32) -> (i32, i32, i32) {
    %c0_i32 = arith.constant 0 : i32
    %c0_i32_0 = arith.constant 0 : i32
    return %arg0, %c0_i32, %arg1 : i32, i32, i32
  }
  func.func @transform_1(%arg0: i32, %arg1: i32, %arg2: i32) -> (i32, i32, i32) {
    %c0_i32 = arith.constant 0 : i32
    %c0_i32_0 = arith.constant 0 : i32
    %c0_i32_1 = arith.constant 0 : i32
    return %arg0, %c0_i32, %c0_i32_0 : i32, i32, i32
  }
  func.func @transform_2(%arg0: i32, %arg1: i32, %arg2: i32) -> (i32, i32, i32) {
    %c0_i32 = arith.constant 0 : i32
    return %arg0, %arg2, %arg1 : i32, i32, i32
  }
}

module attributes {stable_mosaic.version = 11 : i64} {
  func.func @_linear_add_ln_kernel(%arg0: i32, %arg1: i32, %arg2: memref<16x32xbf16, #tpu.memory_space<vmem>>, %arg3: memref<32x32xbf16, #tpu.memory_space<vmem>>, %arg4: memref<1x32xf32, #tpu.memory_space<vmem>>, %arg5: memref<16x32xbf16, #tpu.memory_space<vmem>>, %arg6: memref<1x32xf32, #tpu.memory_space<vmem>>, %arg7: memref<1x32xf32, #tpu.memory_space<vmem>>, %arg8: memref<16x32xbf16, #tpu.memory_space<vmem>>, %arg9: memref<16x32xf32, #tpu.memory_space<vmem>>) attributes {dimension_semantics = [#tpu.dimension_semantics<parallel>, #tpu.dimension_semantics<arbitrary>], iteration_bounds = array<i64: 1, 1>, scalar_prefetch = 0 : i64, scratch_operands = 1 : i64, tpu.core_type = #tpu.core_type<tc>, window_params = [{transform_indices = @transform_0, window_bounds = array<i64: 16, 32>}, {transform_indices = @transform_1, window_bounds = array<i64: 32, 32>}, {pipeline_mode = #tpu.pipeline_mode<synchronous>, transform_indices = @transform_2, window_bounds = array<i64: 1, 32>}, {transform_indices = @transform_3, window_bounds = array<i64: 16, 32>}, {pipeline_mode = #tpu.pipeline_mode<synchronous>, transform_indices = @transform_4, window_bounds = array<i64: 1, 32>}, {pipeline_mode = #tpu.pipeline_mode<synchronous>, transform_indices = @transform_5, window_bounds = array<i64: 1, 32>}, {transform_indices = @transform_6, window_bounds = array<i64: 16, 32>}]} {
    %c0_i32 = arith.constant 0 : i32
    %0 = arith.cmpi eq, %arg1, %c0_i32 : i32
    %1 = arith.extui %0 : i1 to i32
    %c0_i32_0 = arith.constant 0 : i32
    %2 = arith.cmpi ne, %1, %c0_i32_0 : i32
    scf.if %2 {
      %cst_10 = arith.constant 0.000000e+00 : f32
      %12 = vector.broadcast %cst_10 : f32 to vector<16x32xf32>
      %c0_11 = arith.constant 0 : index
      %c0_12 = arith.constant 0 : index
      %13 = vector.load %arg9[%c0_11, %c0_12] : memref<16x32xf32, #tpu.memory_space<vmem>>, vector<16x32xf32>
      tpu.vector_store %arg9[%c0_11, %c0_12], %12 {strides = array<i32>} : memref<16x32xf32, #tpu.memory_space<vmem>>, vector<16x32xf32>,
    } else {
    }
    %c0 = arith.constant 0 : index
    %c0_1 = arith.constant 0 : index
    %3 = vector.load %arg9[%c0, %c0_1] : memref<16x32xf32, #tpu.memory_space<vmem>>, vector<16x32xf32>
    %c0_2 = arith.constant 0 : index
    %c0_3 = arith.constant 0 : index
    %4 = vector.load %arg2[%c0_2, %c0_3] : memref<16x32xbf16, #tpu.memory_space<vmem>>, vector<16x32xbf16>
    %c0_4 = arith.constant 0 : index
    %c0_5 = arith.constant 0 : index
    %5 = vector.load %arg3[%c0_4, %c0_5] : memref<32x32xbf16, #tpu.memory_space<vmem>>, vector<32x32xbf16>
    %cst = arith.constant dense<0.000000e+00> : vector<16x32xf32>
    %6 = tpu.matmul %4, %5, %cst {dimension_numbers = #tpu.dot_dimension_numbers<[1], [0], [0], [1], [0, 0, 1, 1], [], []>} : vector<16x32xbf16>, vector<32x32xbf16>, vector<16x32xf32> -> vector<16x32xf32>
    %7 = arith.addf %3, %6 : vector<16x32xf32>
    %c0_6 = arith.constant 0 : index
    %c0_7 = arith.constant 0 : index
    %8 = vector.load %arg9[%c0_6, %c0_7] : memref<16x32xf32, #tpu.memory_space<vmem>>, vector<16x32xf32>
    tpu.vector_store %arg9[%c0_6, %c0_7], %7 {strides = array<i32>} : memref<16x32xf32, #tpu.memory_space<vmem>>, vector<16x32xf32>,
    %c0_i32_8 = arith.constant 0 : i32
    %9 = arith.cmpi eq, %arg1, %c0_i32_8 : i32
    %10 = arith.extui %9 : i1 to i32
    %c0_i32_9 = arith.constant 0 : i32
    %11 = arith.cmpi ne, %10, %c0_i32_9 : i32
    scf.if %11 {
      %c0_10 = arith.constant 0 : index
      %c0_11 = arith.constant 0 : index
      %12 = vector.load %arg9[%c0_10, %c0_11] : memref<16x32xf32, #tpu.memory_space<vmem>>, vector<16x32xf32>
      %c0_12 = arith.constant 0 : index
      %c0_13 = arith.constant 0 : index
      %13 = vector.load %arg4[%c0_12, %c0_13] : memref<1x32xf32, #tpu.memory_space<vmem>>, vector<1x32xf32>
      %14 = vector.broadcast %13 : vector<1x32xf32> to vector<16x32xf32>
      %15 = arith.addf %12, %14 : vector<16x32xf32>
      %c0_14 = arith.constant 0 : index
      %c0_15 = arith.constant 0 : index
      %16 = vector.load %arg5[%c0_14, %c0_15] : memref<16x32xbf16, #tpu.memory_space<vmem>>, vector<16x32xbf16>
      %17 = arith.extf %16 : vector<16x32xbf16> to vector<16x32xf32>
      %18 = arith.addf %15, %17 : vector<16x32xf32>
      %cst_16 = arith.constant dense<0.000000e+00> : vector<16xf32>
      %19 = vector.multi_reduction <add>, %18, %cst_16 [1] : vector<16x32xf32> to vector<16xf32>
      %20 = vector.shape_cast %19 : vector<16xf32> to vector<16x1xf32>
      %cst_17 = arith.constant 3.200000e+01 : f32
      %21 = vector.broadcast %cst_17 : f32 to vector<16x1xf32>
      %22 = arith.divf %20, %21 : vector<16x1xf32>
      %23 = vector.broadcast %22 : vector<16x1xf32> to vector<16x32xf32>
      %24 = arith.subf %18, %23 : vector<16x32xf32>
      %25 = arith.mulf %24, %24 : vector<16x32xf32>
      %cst_18 = arith.constant dense<0.000000e+00> : vector<16xf32>
      %26 = vector.multi_reduction <add>, %25, %cst_18 [1] : vector<16x32xf32> to vector<16xf32>
      %27 = vector.shape_cast %26 : vector<16xf32> to vector<16x1xf32>
      %cst_19 = arith.constant 3.200000e+01 : f32
      %28 = vector.broadcast %cst_19 : f32 to vector<16x1xf32>
      %29 = arith.divf %27, %28 : vector<16x1xf32>
      %cst_20 = arith.constant 9.99999996E-13 : f32
      %30 = vector.broadcast %cst_20 : f32 to vector<16x1xf32>
      %31 = arith.addf %29, %30 : vector<16x1xf32>
      %32 = math.rsqrt %31 : vector<16x1xf32>
      %33 = vector.broadcast %32 : vector<16x1xf32> to vector<16x32xf32>
      %34 = arith.mulf %24, %33 : vector<16x32xf32>
      %c0_21 = arith.constant 0 : index
      %c0_22 = arith.constant 0 : index
      %35 = vector.load %arg6[%c0_21, %c0_22] : memref<1x32xf32, #tpu.memory_space<vmem>>, vector<1x32xf32>
      %36 = vector.broadcast %35 : vector<1x32xf32> to vector<16x32xf32>
      %37 = arith.mulf %34, %36 : vector<16x32xf32>
      %c0_23 = arith.constant 0 : index
      %c0_24 = arith.constant 0 : index
      %38 = vector.load %arg7[%c0_23, %c0_24] : memref<1x32xf32, #tpu.memory_space<vmem>>, vector<1x32xf32>
      %39 = vector.broadcast %38 : vector<1x32xf32> to vector<16x32xf32>
      %40 = arith.addf %37, %39 : vector<16x32xf32>
      %41 = arith.truncf %40 : vector<16x32xf32> to vector<16x32xbf16>
      %c0_25 = arith.constant 0 : index
      %c0_26 = arith.constant 0 : index
      %42 = vector.load %arg8[%c0_25, %c0_26] : memref<16x32xbf16, #tpu.memory_space<vmem>>, vector<16x32xbf16>
      tpu.vector_store %arg8[%c0_25, %c0_26], %41 {strides = array<i32>} : memref<16x32xbf16, #tpu.memory_space<vmem>>, vector<16x32xbf16>,
    } else {
    }
    return
  }
  func.func @transform_0(%arg0: i32, %arg1: i32) -> (i32, i32) {
    %c0_i32 = arith.constant 0 : i32
    return %arg0, %arg1 : i32, i32
  }
  func.func @transform_1(%arg0: i32, %arg1: i32) -> (i32, i32) {
    %c0_i32 = arith.constant 0 : i32
    %c0_i32_0 = arith.constant 0 : i32
    return %arg1, %c0_i32 : i32, i32
  }
  func.func @transform_2(%arg0: i32, %arg1: i32) -> (i32, i32) {
    %c0_i32 = arith.constant 0 : i32
    %c0_i32_0 = arith.constant 0 : i32
    %c0_i32_1 = arith.constant 0 : i32
    return %c0_i32, %c0_i32_0 : i32, i32
  }
  func.func @transform_3(%arg0: i32, %arg1: i32) -> (i32, i32) {
    %c0_i32 = arith.constant 0 : i32
    %c0_i32_0 = arith.constant 0 : i32
    return %arg0, %c0_i32 : i32, i32
  }
  func.func @transform_4(%arg0: i32, %arg1: i32) -> (i32, i32) {
    %c0_i32 = arith.constant 0 : i32
    %c0_i32_0 = arith.constant 0 : i32
    %c0_i32_1 = arith.constant 0 : i32
    return %c0_i32, %c0_i32_0 : i32, i32
  }
  func.func @transform_5(%arg0: i32, %arg1: i32) -> (i32, i32) {
    %c0_i32 = arith.constant 0 : i32
    %c0_i32_0 = arith.constant 0 : i32
    %c0_i32_1 = arith.constant 0 : i32
    return %c0_i32, %c0_i32_0 : i32, i32
  }
  func.func @transform_6(%arg0: i32, %arg1: i32) -> (i32, i32) {
    %c0_i32 = arith.constant 0 : i32
    %c0_i32_0 = arith.constant 0 : i32
    return %arg0, %c0_i32 : i32, i32
  }
}

module attributes {stable_mosaic.version = 11 : i64} {
  func.func @_linear_kernel(%arg0: i32, %arg1: i32, %arg2: i32, %arg3: memref<16x32xbf16, #tpu.memory_space<vmem>>, %arg4: memref<32x64xbf16, #tpu.memory_space<vmem>>, %arg5: memref<1x64xf32, #tpu.memory_space<vmem>>, %arg6: memref<16x64xbf16, #tpu.memory_space<vmem>>, %arg7: memref<16x64xf32, #tpu.memory_space<vmem>>) attributes {dimension_semantics = [#tpu.dimension_semantics<parallel>, #tpu.dimension_semantics<parallel>, #tpu.dimension_semantics<arbitrary>], iteration_bounds = array<i64: 1, 1, 1>, scalar_prefetch = 0 : i64, scratch_operands = 1 : i64, tpu.core_type = #tpu.core_type<tc>, window_params = [{transform_indices = @transform_0, window_bounds = array<i64: 16, 32>}, {transform_indices = @transform_1, window_bounds = array<i64: 32, 64>}, {transform_indices = @transform_2, window_bounds = array<i64: 1, 64>}, {transform_indices = @transform_3, window_bounds = array<i64: 16, 64>}]} {
    %c0_i32 = arith.constant 0 : i32
    %0 = arith.cmpi eq, %arg2, %c0_i32 : i32
    %1 = arith.extui %0 : i1 to i32
    %c0_i32_0 = arith.constant 0 : i32
    %2 = arith.cmpi ne, %1, %c0_i32_0 : i32
    scf.if %2 {
      %cst_10 = arith.constant 0.000000e+00 : f32
      %12 = vector.broadcast %cst_10 : f32 to vector<16x64xf32>
      %c0_11 = arith.constant 0 : index
      %c0_12 = arith.constant 0 : index
      %13 = vector.load %arg7[%c0_11, %c0_12] : memref<16x64xf32, #tpu.memory_space<vmem>>, vector<16x64xf32>
      tpu.vector_store %arg7[%c0_11, %c0_12], %12 {strides = array<i32>} : memref<16x64xf32, #tpu.memory_space<vmem>>, vector<16x64xf32>,
    } else {
    }
    %c0 = arith.constant 0 : index
    %c0_1 = arith.constant 0 : index
    %3 = vector.load %arg7[%c0, %c0_1] : memref<16x64xf32, #tpu.memory_space<vmem>>, vector<16x64xf32>
    %c0_2 = arith.constant 0 : index
    %c0_3 = arith.constant 0 : index
    %4 = vector.load %arg3[%c0_2, %c0_3] : memref<16x32xbf16, #tpu.memory_space<vmem>>, vector<16x32xbf16>
    %c0_4 = arith.constant 0 : index
    %c0_5 = arith.constant 0 : index
    %5 = vector.load %arg4[%c0_4, %c0_5] : memref<32x64xbf16, #tpu.memory_space<vmem>>, vector<32x64xbf16>
    %cst = arith.constant dense<0.000000e+00> : vector<16x64xf32>
    %6 = tpu.matmul %4, %5, %cst {dimension_numbers = #tpu.dot_dimension_numbers<[1], [0], [0], [1], [0, 0, 1, 1], [], []>} : vector<16x32xbf16>, vector<32x64xbf16>, vector<16x64xf32> -> vector<16x64xf32>
    %7 = arith.addf %3, %6 : vector<16x64xf32>
    %c0_6 = arith.constant 0 : index
    %c0_7 = arith.constant 0 : index
    %8 = vector.load %arg7[%c0_6, %c0_7] : memref<16x64xf32, #tpu.memory_space<vmem>>, vector<16x64xf32>
    tpu.vector_store %arg7[%c0_6, %c0_7], %7 {strides = array<i32>} : memref<16x64xf32, #tpu.memory_space<vmem>>, vector<16x64xf32>,
    %c0_i32_8 = arith.constant 0 : i32
    %9 = arith.cmpi eq, %arg2, %c0_i32_8 : i32
    %10 = arith.extui %9 : i1 to i32
    %c0_i32_9 = arith.constant 0 : i32
    %11 = arith.cmpi ne, %10, %c0_i32_9 : i32
    scf.if %11 {
      %c0_10 = arith.constant 0 : index
      %c0_11 = arith.constant 0 : index
      %12 = vector.load %arg7[%c0_10, %c0_11] : memref<16x64xf32, #tpu.memory_space<vmem>>, vector<16x64xf32>
      %c0_12 = arith.constant 0 : index
      %c0_13 = arith.constant 0 : index
      %13 = vector.load %arg5[%c0_12, %c0_13] : memref<1x64xf32, #tpu.memory_space<vmem>>, vector<1x64xf32>
      %14 = vector.broadcast %13 : vector<1x64xf32> to vector<16x64xf32>
      %15 = arith.addf %12, %14 : vector<16x64xf32>
      %cst_14 = arith.constant 5.000000e-01 : f32
      %16 = vector.broadcast %cst_14 : f32 to vector<16x64xf32>
      %17 = arith.mulf %16, %15 : vector<16x64xf32>
      %cst_15 = arith.constant 4.471500e-02 : f32
      %18 = vector.broadcast %cst_15 : f32 to vector<16x64xf32>
      %19 = arith.mulf %18, %15 : vector<16x64xf32>
      %20 = arith.mulf %19, %15 : vector<16x64xf32>
      %21 = arith.mulf %20, %15 : vector<16x64xf32>
      %22 = arith.addf %15, %21 : vector<16x64xf32>
      %cst_16 = arith.constant 0.797884583 : f32
      %23 = vector.broadcast %cst_16 : f32 to vector<16x64xf32>
      %24 = arith.mulf %23, %22 : vector<16x64xf32>
      %25 = math.tanh %24 : vector<16x64xf32>
      %cst_17 = arith.constant 1.000000e+00 : f32
      %26 = vector.broadcast %cst_17 : f32 to vector<16x64xf32>
      %27 = arith.addf %26, %25 : vector<16x64xf32>
      %28 = arith.mulf %17, %27 : vector<16x64xf32>
      %29 = arith.truncf %28 : vector<16x64xf32> to vector<16x64xbf16>
      %c0_18 = arith.constant 0 : index
      %c0_19 = arith.constant 0 : index
      %30 = vector.load %arg6[%c0_18, %c0_19] : memref<16x64xbf16, #tpu.memory_space<vmem>>, vector<16x64xbf16>
      tpu.vector_store %arg6[%c0_18, %c0_19], %29 {strides = array<i32>} : memref<16x64xbf16, #tpu.memory_space<vmem>>, vector<16x64xbf16>,
    } else {
    }
    return
  }
  func.func @transform_0(%arg0: i32, %arg1: i32, %arg2: i32) -> (i32, i32) {
    %c0_i32 = arith.constant 0 : i32
    return %arg0, %arg2 : i32, i32
  }
  func.func @transform_1(%arg0: i32, %arg1: i32, %arg2: i32) -> (i32, i32) {
    %c0_i32 = arith.constant 0 : i32
    return %arg2, %arg1 : i32, i32
  }
  func.func @transform_2(%arg0: i32, %arg1: i32, %arg2: i32) -> (i32, i32) {
    %c0_i32 = arith.constant 0 : i32
    %c0_i32_0 = arith.constant 0 : i32
    return %c0_i32, %arg1 : i32, i32
  }
  func.func @transform_3(%arg0: i32, %arg1: i32, %arg2: i32) -> (i32, i32) {
    %c0_i32 = arith.constant 0 : i32
    return %arg0, %arg1 : i32, i32
  }
}

module attributes {stable_mosaic.version = 11 : i64} {
  func.func @_linear_add_ln_kernel(%arg0: i32, %arg1: i32, %arg2: memref<16x64xbf16, #tpu.memory_space<vmem>>, %arg3: memref<64x32xbf16, #tpu.memory_space<vmem>>, %arg4: memref<1x32xf32, #tpu.memory_space<vmem>>, %arg5: memref<16x32xbf16, #tpu.memory_space<vmem>>, %arg6: memref<1x32xf32, #tpu.memory_space<vmem>>, %arg7: memref<1x32xf32, #tpu.memory_space<vmem>>, %arg8: memref<16x32xbf16, #tpu.memory_space<vmem>>, %arg9: memref<16x32xf32, #tpu.memory_space<vmem>>) attributes {dimension_semantics = [#tpu.dimension_semantics<parallel>, #tpu.dimension_semantics<arbitrary>], iteration_bounds = array<i64: 1, 1>, scalar_prefetch = 0 : i64, scratch_operands = 1 : i64, tpu.core_type = #tpu.core_type<tc>, window_params = [{transform_indices = @transform_0, window_bounds = array<i64: 16, 64>}, {transform_indices = @transform_1, window_bounds = array<i64: 64, 32>}, {pipeline_mode = #tpu.pipeline_mode<synchronous>, transform_indices = @transform_2, window_bounds = array<i64: 1, 32>}, {transform_indices = @transform_3, window_bounds = array<i64: 16, 32>}, {pipeline_mode = #tpu.pipeline_mode<synchronous>, transform_indices = @transform_4, window_bounds = array<i64: 1, 32>}, {pipeline_mode = #tpu.pipeline_mode<synchronous>, transform_indices = @transform_5, window_bounds = array<i64: 1, 32>}, {transform_indices = @transform_6, window_bounds = array<i64: 16, 32>}]} {
    %c0_i32 = arith.constant 0 : i32
    %0 = arith.cmpi eq, %arg1, %c0_i32 : i32
    %1 = arith.extui %0 : i1 to i32
    %c0_i32_0 = arith.constant 0 : i32
    %2 = arith.cmpi ne, %1, %c0_i32_0 : i32
    scf.if %2 {
      %cst_10 = arith.constant 0.000000e+00 : f32
      %12 = vector.broadcast %cst_10 : f32 to vector<16x32xf32>
      %c0_11 = arith.constant 0 : index
      %c0_12 = arith.constant 0 : index
      %13 = vector.load %arg9[%c0_11, %c0_12] : memref<16x32xf32, #tpu.memory_space<vmem>>, vector<16x32xf32>
      tpu.vector_store %arg9[%c0_11, %c0_12], %12 {strides = array<i32>} : memref<16x32xf32, #tpu.memory_space<vmem>>, vector<16x32xf32>,
    } else {
    }
    %c0 = arith.constant 0 : index
    %c0_1 = arith.constant 0 : index
    %3 = vector.load %arg9[%c0, %c0_1] : memref<16x32xf32, #tpu.memory_space<vmem>>, vector<16x32xf32>
    %c0_2 = arith.constant 0 : index
    %c0_3 = arith.constant 0 : index
    %4 = vector.load %arg2[%c0_2, %c0_3] : memref<16x64xbf16, #tpu.memory_space<vmem>>, vector<16x64xbf16>
    %c0_4 = arith.constant 0 : index
    %c0_5 = arith.constant 0 : index
    %5 = vector.load %arg3[%c0_4, %c0_5] : memref<64x32xbf16, #tpu.memory_space<vmem>>, vector<64x32xbf16>
    %cst = arith.constant dense<0.000000e+00> : vector<16x32xf32>
    %6 = tpu.matmul %4, %5, %cst {dimension_numbers = #tpu.dot_dimension_numbers<[1], [0], [0], [1], [0, 0, 1, 1], [], []>} : vector<16x64xbf16>, vector<64x32xbf16>, vector<16x32xf32> -> vector<16x32xf32>
    %7 = arith.addf %3, %6 : vector<16x32xf32>
    %c0_6 = arith.constant 0 : index
    %c0_7 = arith.constant 0 : index
    %8 = vector.load %arg9[%c0_6, %c0_7] : memref<16x32xf32, #tpu.memory_space<vmem>>, vector<16x32xf32>
    tpu.vector_store %arg9[%c0_6, %c0_7], %7 {strides = array<i32>} : memref<16x32xf32, #tpu.memory_space<vmem>>, vector<16x32xf32>,
    %c0_i32_8 = arith.constant 0 : i32
    %9 = arith.cmpi eq, %arg1, %c0_i32_8 : i32
    %10 = arith.extui %9 : i1 to i32
    %c0_i32_9 = arith.constant 0 : i32
    %11 = arith.cmpi ne, %10, %c0_i32_9 : i32
    scf.if %11 {
      %c0_10 = arith.constant 0 : index
      %c0_11 = arith.constant 0 : index
      %12 = vector.load %arg9[%c0_10, %c0_11] : memref<16x32xf32, #tpu.memory_space<vmem>>, vector<16x32xf32>
      %c0_12 = arith.constant 0 : index
      %c0_13 = arith.constant 0 : index
      %13 = vector.load %arg4[%c0_12, %c0_13] : memref<1x32xf32, #tpu.memory_space<vmem>>, vector<1x32xf32>
      %14 = vector.broadcast %13 : vector<1x32xf32> to vector<16x32xf32>
      %15 = arith.addf %12, %14 : vector<16x32xf32>
      %c0_14 = arith.constant 0 : index
      %c0_15 = arith.constant 0 : index
      %16 = vector.load %arg5[%c0_14, %c0_15] : memref<16x32xbf16, #tpu.memory_space<vmem>>, vector<16x32xbf16>
      %17 = arith.extf %16 : vector<16x32xbf16> to vector<16x32xf32>
      %18 = arith.addf %15, %17 : vector<16x32xf32>
      %cst_16 = arith.constant dense<0.000000e+00> : vector<16xf32>
      %19 = vector.multi_reduction <add>, %18, %cst_16 [1] : vector<16x32xf32> to vector<16xf32>
      %20 = vector.shape_cast %19 : vector<16xf32> to vector<16x1xf32>
      %cst_17 = arith.constant 3.200000e+01 : f32
      %21 = vector.broadcast %cst_17 : f32 to vector<16x1xf32>
      %22 = arith.divf %20, %21 : vector<16x1xf32>
      %23 = vector.broadcast %22 : vector<16x1xf32> to vector<16x32xf32>
      %24 = arith.subf %18, %23 : vector<16x32xf32>
      %25 = arith.mulf %24, %24 : vector<16x32xf32>
      %cst_18 = arith.constant dense<0.000000e+00> : vector<16xf32>
      %26 = vector.multi_reduction <add>, %25, %cst_18 [1] : vector<16x32xf32> to vector<16xf32>
      %27 = vector.shape_cast %26 : vector<16xf32> to vector<16x1xf32>
      %cst_19 = arith.constant 3.200000e+01 : f32
      %28 = vector.broadcast %cst_19 : f32 to vector<16x1xf32>
      %29 = arith.divf %27, %28 : vector<16x1xf32>
      %cst_20 = arith.constant 9.99999996E-13 : f32
      %30 = vector.broadcast %cst_20 : f32 to vector<16x1xf32>
      %31 = arith.addf %29, %30 : vector<16x1xf32>
      %32 = math.rsqrt %31 : vector<16x1xf32>
      %33 = vector.broadcast %32 : vector<16x1xf32> to vector<16x32xf32>
      %34 = arith.mulf %24, %33 : vector<16x32xf32>
      %c0_21 = arith.constant 0 : index
      %c0_22 = arith.constant 0 : index
      %35 = vector.load %arg6[%c0_21, %c0_22] : memref<1x32xf32, #tpu.memory_space<vmem>>, vector<1x32xf32>
      %36 = vector.broadcast %35 : vector<1x32xf32> to vector<16x32xf32>
      %37 = arith.mulf %34, %36 : vector<16x32xf32>
      %c0_23 = arith.constant 0 : index
      %c0_24 = arith.constant 0 : index
      %38 = vector.load %arg7[%c0_23, %c0_24] : memref<1x32xf32, #tpu.memory_space<vmem>>, vector<1x32xf32>
      %39 = vector.broadcast %38 : vector<1x32xf32> to vector<16x32xf32>
      %40 = arith.addf %37, %39 : vector<16x32xf32>
      %41 = arith.truncf %40 : vector<16x32xf32> to vector<16x32xbf16>
      %c0_25 = arith.constant 0 : index
      %c0_26 = arith.constant 0 : index
      %42 = vector.load %arg8[%c0_25, %c0_26] : memref<16x32xbf16, #tpu.memory_space<vmem>>, vector<16x32xbf16>
      tpu.vector_store %arg8[%c0_25, %c0_26], %41 {strides = array<i32>} : memref<16x32xbf16, #tpu.memory_space<vmem>>, vector<16x32xbf16>,
    } else {
    }
    return
  }
  func.func @transform_0(%arg0: i32, %arg1: i32) -> (i32, i32) {
    %c0_i32 = arith.constant 0 : i32
    return %arg0, %arg1 : i32, i32
  }
  func.func @transform_1(%arg0: i32, %arg1: i32) -> (i32, i32) {
    %c0_i32 = arith.constant 0 : i32
    %c0_i32_0 = arith.constant 0 : i32
    return %arg1, %c0_i32 : i32, i32
  }
  func.func @transform_2(%arg0: i32, %arg1: i32) -> (i32, i32) {
    %c0_i32 = arith.constant 0 : i32
    %c0_i32_0 = arith.constant 0 : i32
    %c0_i32_1 = arith.constant 0 : i32
    return %c0_i32, %c0_i32_0 : i32, i32
  }
  func.func @transform_3(%arg0: i32, %arg1: i32) -> (i32, i32) {
    %c0_i32 = arith.constant 0 : i32
    %c0_i32_0 = arith.constant 0 : i32
    return %arg0, %c0_i32 : i32, i32
  }
  func.func @transform_4(%arg0: i32, %arg1: i32) -> (i32, i32) {
    %c0_i32 = arith.constant 0 : i32
    %c0_i32_0 = arith.constant 0 : i32
    %c0_i32_1 = arith.constant 0 : i32
    return %c0_i32, %c0_i32_0 : i32, i32
  }
  func.func @transform_5(%arg0: i32, %arg1: i32) -> (i32, i32) {
    %c0_i32 = arith.constant 0 : i32
    %c0_i32_0 = arith.constant 0 : i32
    %c0_i32_1 = arith.constant 0 : i32
    return %c0_i32, %c0_i32_0 : i32, i32
  }
  func.func @transform_6(%arg0: i32, %arg1: i32) -> (i32, i32) {
    %c0_i32 = arith.constant 0 : i32
    %c0_i32_0 = arith.constant 0 : i32
    return %arg0, %c0_i32 : i32, i32
  }
}

</mosaic_0001>

<llo_original>
// kernel: text_encoder_forward.12
$region0: #{text_encoder_forward.12}
  #allocation0 [shape = 'u32[]', space=smem, size = 0x4, offset = 0x4, fixed_abs, tag = 'smem constant byte address 0x4 - core index']
  #allocation1 [shape = 'u32[144,128]{1,0:T(1,128)}', space=vmem, size = 0x12000, scoped, tag = 'internal scratch']
  #allocation2 [shape = 'f32[16,96]{1,0:T(8,128)}', space=vmem, size = 0x2000, scoped, tag = 'scratch operand']
  %s0 = inlined_call_operand.vmem [shape: bf16[16,32], index: 0, kind: input, shape index: {}]
  %s1 = inlined_call_operand.vmem [shape: bf16[32,96], index: 1, kind: input, shape index: {}]
  %s2 = inlined_call_operand.vmem [shape: f32[1,96], index: 2, kind: input, shape index: {}]
  %s3 = inlined_call_operand.vmem [shape: bf16[16,96], index: 3, kind: output, shape index: {}]
  %s4 = sld [smem:[#allocation0]]
  $region30: #{text_encoder_forward.12} parent=0
    _
  %s6 = ssub.s32 1, %s4
  %s7 = scalar_select 0, %s6, %s4
  // Predicated region
  $region2: #{text_encoder_forward.12} parent=0 // pred_check
    _
  $region3: #{text_encoder_forward.12} parent=0 // pred_check_branch
    %9 = sbr.rel (0) target = $region5
  $region4: #{text_encoder_forward.12} parent=0 // pred_region
    _
  $region5: #{text_encoder_forward.12} parent=0 // pred_fallthru
    _
  // Predicated region
  $region6: #{text_encoder_forward.12} parent=0 // pred_check
    _
  $region7: #{text_encoder_forward.12} parent=0 // pred_check_branch
    %11 = sbr.rel (0) target = $region9
  $region8: #{text_encoder_forward.12} parent=0 // pred_region
    _
  $region9: #{text_encoder_forward.12} parent=0 // pred_fallthru
    _
  // Predicated region
  $region10: #{text_encoder_forward.12} parent=0 // pred_check
    _
  $region11: #{text_encoder_forward.12} parent=0 // pred_check_branch
    %13 = sbr.rel (0) target = $region13
  $region12: #{text_encoder_forward.12} parent=0 // pred_region
    _
  $region13: #{text_encoder_forward.12} parent=0 // pred_fallthru
    _
  %p15 = scmp.eq.s32.totalorder 0, 0
  // Predicated region
  $region14: #{text_encoder_forward.12} parent=0 // pred_check
    %p16 = pneg %p15
  $region15: #{text_encoder_forward.12} parent=0 // pred_check_branch
    %18 = sbr.rel (%p16) target = $region17
  $region16: #{text_encoder_forward.12} parent=0 // pred_region
    %vm19 = vcmask 785408
    %20 = vst.msk [vmem:[#allocation2] sm:$0xff] %vm19, 0.0
    %21 = vst.msk [vmem:[#allocation2 + $0x8] sm:$0xff] %vm19, 0.0
  $region17: #{text_encoder_forward.12} parent=0 // pred_fallthru
    _
  %v22 = vld [vmem:[#allocation2] sm:$0xff]
  %v23 = vld [vmem:[#allocation2 + $0x8] sm:$0xff]
  %v24 = vld [vmem:[%s0] sm:$0xf]
  %v25 = vld [vmem:[%s0 + $0x4] sm:$0xf]
  %v26 = vld [vmem:[%s1] sm:$0xf]
  %v27 = vld [vmem:[%s1 + $0x4] sm:$0xf]
  %v28 = vld [vmem:[%s1 + $0x8] sm:$0xf]
  %v29 = vld [vmem:[%s1 + $0xc] sm:$0xf]
  %v32 = vunpack.c.l.b16 %v24
  %v33 = vunpack.c.l.b16 %v25
  %v34 = vpack.c.b16 %v33, %v32
  %v39 = vunpack.c.l.b16 %v26
  %v40 = vunpack.c.l.b16 %v27
  %v41 = vunpack.c.l.b16 %v28
  %v42 = vunpack.c.l.b16 %v29
  %v43 = vpack.c.b16 %v40, %v39
  %v44 = vpack.c.b16 %v42, %v41
  %vm47 = vcmask 261120
  %v49 = vsel %vm47, %v34, 0
  %51 = vmatprep.subr.bf16.mxu0 0
  %52 = vmatpush1.bf16.msra.mxu0 %v43
  %53 = vmatprep.subr.bf16.mxu0 0
  %54 = vmatpush1.bf16.msra.mxu0 %v44
  %55 = vmatprep.subr.bf16.mxu0 0
  %56 = vmatpush1.bf16.msra.mxu0 0
  %57 = vmatprep.subr.bf16.mxu0 0
  %58 = vmatpush1.bf16.msra.mxu0 0
  %59 = vmatprep.subr.bf16.mxu0 0
  %60 = vmatpush1.bf16.msra.mxu0 0
  %61 = vmatprep.subr.bf16.mxu0 0
  %62 = vmatpush1.bf16.msra.mxu0 0
  %63 = vmatprep.subr.bf16.mxu0 0
  %64 = vmatpush1.bf16.msra.mxu0 0
  %65 = vmatprep.subr.bf16.mxu0 0
  %66 = vmatpush1.bf16.msra.mxu0 0
  %67 = vmatprep.subr.bf16.mxu0 0
  %68 = vmatpush1.bf16.msra.mxu0 0
  %69 = vmatprep.subr.bf16.mxu0 0
  %70 = vmatpush1.bf16.msra.mxu0 0
  %71 = vmatprep.subr.bf16.mxu0 0
  %72 = vmatpush1.bf16.msra.mxu0 0
  %73 = vmatprep.subr.bf16.mxu0 0
  %74 = vmatpush1.bf16.msra.mxu0 0
  %75 = vmatprep.subr.bf16.mxu0 0
  %76 = vmatpush1.bf16.msra.mxu0 0
  %77 = vmatprep.subr.bf16.mxu0 0
  %78 = vmatpush1.bf16.msra.mxu0 0
  %79 = vmatprep.subr.bf16.mxu0 0
  %80 = vmatpush1.bf16.msra.mxu0 0
  %81 = vmatprep.subr.bf16.mxu0 0
  %82 = vmatpush1.bf16.msra.mxu0 0
  %83 = vmatprep.mubr.bf16.mxu0 0
  %84 = vmatmul.mubr.bf16.gmra.mrb[0].mxu0 %v49
  %v85 = vpop.f32.mrb[0].mxu0
  %v86 = vadd.f32 0.0, %v85
  %v87 = vpop.f32.mrb[0].mxu0
  %v88 = vpop.f32.mrb[0].mxu0
  %v89 = vadd.f32 0.0, %v88
  %v90 = vpop.f32.mrb[0].mxu0
  %91 = vdwg.mxu0
  %v92 = vadd.f32 %v22, %v86
  %v93 = vadd.f32 %v23, %v89
  %vm94 = vcmask 785408
  %95 = vst.msk [vmem:[#allocation2] sm:$0xff] %vm94, %v92
  %96 = vst.msk [vmem:[#allocation2 + $0x8] sm:$0xff] %vm94, %v93
  // Predicated region
  $region18: #{text_encoder_forward.12} parent=0 // pred_check
    %p97 = pneg %p15
  $region19: #{text_encoder_forward.12} parent=0 // pred_check_branch
    %99 = sbr.rel (%p97) target = $region21
  $region20: #{text_encoder_forward.12} parent=0 // pred_region
    %v100 = vld [vmem:[#allocation2] sm:$0xff]
    %v101 = vld [vmem:[#allocation2 + $0x8] sm:$0xff]
    %v102 = vld [vmem:[%s2] sm:$0x1]
    %v104 = vlaneseq
    %v105 = vshrl.u32 %v104, 7
    %v106 = vsub.s32 0, %v105
    %v107 = vrot.slane %v102, %v106
    %v109 = vadd.f32 %v100, %v107
    %v110 = vadd.f32 %v101, %v107
    %v111 = vpack.c.bf16 %v110, %v109
    %v113 = vunpack.c.l.b16 %v111
    %v114 = vunpack.c.h.b16 %v111
    %v115 = vpack.c.b16 %v113, %v113
    %v116 = vpack.c.b16 %v114, %v114
    %vm119 = vcmask 781312
    %120 = vst.msk [vmem:[%s3] sm:$0xf] %vm119, %v115
    %121 = vst.msk [vmem:[%s3 + $0x4] sm:$0xf] %vm119, %v116
  $region21: #{text_encoder_forward.12} parent=0 // pred_fallthru
    _
  // Predicated region
  $region22: #{text_encoder_forward.12} parent=0 // pred_check
    _
  $region23: #{text_encoder_forward.12} parent=0 // pred_check_branch
    %123 = sbr.rel (0) target = $region25
  $region24: #{text_encoder_forward.12} parent=0 // pred_region
    _
  $region25: #{text_encoder_forward.12} parent=0 // pred_fallthru
    _
  // Predicated region
  $region26: #{text_encoder_forward.12} parent=0 // pred_check
    _
  $region27: #{text_encoder_forward.12} parent=0 // pred_check_branch
    %125 = sbr.rel (0) target = $region29
  $region28: #{text_encoder_forward.12} parent=0 // pred_region
    _
  $region29: #{text_encoder_forward.12} parent=0 // pred_fallthru
    _

// kernel: text_encoder_forward.11
$region0: #{text_encoder_forward.11}
  #allocation0 [shape = 'u32[]', space=smem, size = 0x4, offset = 0x4, fixed_abs, tag = 'smem constant byte address 0x4 - core index']
  #allocation1 [shape = 'u32[144,128]{1,0:T(1,128)}', space=vmem, size = 0x12000, scoped, tag = 'internal scratch']
  %s0 = inlined_call_operand.vmem [shape: f32[16,32], index: 0, kind: input, shape index: {}]
  %s1 = inlined_call_operand.vmem [shape: f32[1,32], index: 1, kind: input, shape index: {}]
  %s2 = inlined_call_operand.vmem [shape: f32[1,32], index: 2, kind: input, shape index: {}]
  %s3 = inlined_call_operand.vmem [shape: bf16[16,32], index: 3, kind: output, shape index: {}]
  %s4 = sld [smem:[#allocation0]]
  $region22: #{text_encoder_forward.11} parent=0
    _
  %s6 = ssub.s32 1, %s4
  %s7 = scalar_select 0, %s6, %s4
  // Predicated region
  $region2: #{text_encoder_forward.11} parent=0 // pred_check
    _
  $region3: #{text_encoder_forward.11} parent=0 // pred_check_branch
    %9 = sbr.rel (0) target = $region5
  $region4: #{text_encoder_forward.11} parent=0 // pred_region
    _
  $region5: #{text_encoder_forward.11} parent=0 // pred_fallthru
    _
  // Predicated region
  $region6: #{text_encoder_forward.11} parent=0 // pred_check
    _
  $region7: #{text_encoder_forward.11} parent=0 // pred_check_branch
    %11 = sbr.rel (0) target = $region9
  $region8: #{text_encoder_forward.11} parent=0 // pred_region
    _
  $region9: #{text_encoder_forward.11} parent=0 // pred_fallthru
    _
  // Predicated region
  $region10: #{text_encoder_forward.11} parent=0 // pred_check
    _
  $region11: #{text_encoder_forward.11} parent=0 // pred_check_branch
    %13 = sbr.rel (0) target = $region13
  $region12: #{text_encoder_forward.11} parent=0 // pred_region
    _
  $region13: #{text_encoder_forward.11} parent=0 // pred_fallthru
    _
  %v14 = vld [vmem:[%s0] sm:$0xff]
  %v15 = vld [vmem:[%s0 + $0x8] sm:$0xff]
  %vm16 = vcmask 261120
  %v17 = vsel %vm16, %v14, 0.0
  %18 = vadd.xlane.f32.xlu0 %v17
  %v19 = vpop.xlane.xlu0 %18
  %v20 = vsel %vm16, %v15, 0.0
  %21 = vadd.xlane.f32.xlu0 %v20
  %v22 = vpop.xlane.xlu0 %21
  %v23 = vrcp.pop 32.0
  %v24 = vmul.f32 %v19, %v23
  %v25 = vmul.f32 %v22, %v23
  %v26 = vsub.f32 %v14, %v24
  %v27 = vsub.f32 %v15, %v25
  %v28 = vmul.f32 %v26, %v26
  %v29 = vmul.f32 %v27, %v27
  %v30 = vsel %vm16, %v28, 0.0
  %31 = vadd.xlane.f32.xlu0 %v30
  %v32 = vpop.xlane.xlu0 %31
  %v33 = vsel %vm16, %v29, 0.0
  %34 = vadd.xlane.f32.xlu0 %v33
  %v35 = vpop.xlane.xlu0 %34
  %v36 = vmul.f32 %v32, %v23
  %v37 = vmul.f32 %v35, %v23
  %v38 = vadd.f32 %v36, 1e-12
  %v39 = vadd.f32 %v37, 1e-12
  %v40 = vrsqrt.pop %v38
  %v41 = vrsqrt.pop %v39
  %v42 = vmul.f32 %v26, %v40
  %v43 = vmul.f32 %v27, %v41
  %v44 = vld [vmem:[%s1] sm:$0x1]
  %v46 = vlaneseq
  %v47 = vshrl.u32 %v46, 7
  %v48 = vsub.s32 0, %v47
  %v49 = vrot.slane %v44, %v48
  %v51 = vmul.f32 %v42, %v49
  %v52 = vmul.f32 %v43, %v49
  %v53 = vld [vmem:[%s2] sm:$0x1]
  %v55 = vlaneseq
  %v56 = vshrl.u32 %v55, 7
  %v57 = vsub.s32 0, %v56
  %v58 = vrot.slane %v53, %v57
  %v60 = vadd.f32 %v51, %v58
  %v61 = vadd.f32 %v52, %v58
  %v62 = vpack.c.bf16 %v61, %v60
  %v64 = vunpack.c.l.b16 %v62
  %v65 = vunpack.c.h.b16 %v62
  %v66 = vpack.c.b16 %v64, %v64
  %v67 = vpack.c.b16 %v65, %v65
  %vm70 = vcmask 257024
  %71 = vst.msk [vmem:[%s3] sm:$0xf] %vm70, %v66
  %72 = vst.msk [vmem:[%s3 + $0x4] sm:$0xf] %vm70, %v67
  // Predicated region
  $region14: #{text_encoder_forward.11} parent=0 // pred_check
    _
  $region15: #{text_encoder_forward.11} parent=0 // pred_check_branch
    %74 = sbr.rel (0) target = $region17
  $region16: #{text_encoder_forward.11} parent=0 // pred_region
    _
  $region17: #{text_encoder_forward.11} parent=0 // pred_fallthru
    _
  // Predicated region
  $region18: #{text_encoder_forward.11} parent=0 // pred_check
    _
  $region19: #{text_encoder_forward.11} parent=0 // pred_check_branch
    %76 = sbr.rel (0) target = $region21
  $region20: #{text_encoder_forward.11} parent=0 // pred_region
    _
  $region21: #{text_encoder_forward.11} parent=0 // pred_fallthru
    _

// kernel: text_encoder_forward.13
$region0: #{text_encoder_forward.13}
  #allocation0 [shape = 'u32[]', space=smem, size = 0x4, offset = 0x4, fixed_abs, tag = 'smem constant byte address 0x4 - core index']
  #allocation1 [shape = 'u32[144,128]{1,0:T(1,128)}', space=vmem, size = 0x12000, scoped, tag = 'internal scratch']
  %s0 = inlined_call_operand.vmem [shape: bf16[2,8,96], index: 0, kind: input, shape index: {}]
  %s1 = inlined_call_operand.vmem [shape: f32[2,1,8], index: 1, kind: input, shape index: {}]
  %s2 = inlined_call_operand.vmem [shape: bf16[2,8,32], index: 2, kind: output, shape index: {}]
  %s3 = sld [smem:[#allocation0]]
  $region41: #{text_encoder_forward.13} parent=0
    _
  %s5 = ssub.s32 1, %s3
  %s6 = scalar_select 0, %s5, %s3
  loop: start=0, step=1, limit=4
  $region2: #{text_encoder_forward.13} parent=0 // loop_pre_header
    _
  $region3: #{text_encoder_forward.13} parent=0 // loop_header
    %s8 = sphi 0, %s12
    %p9 = scmp.ge.s32.totalorder %s8, 4
    %s15 = sphi 0, %s34
    %s16 = sphi 0, %s30
    %s17 = sphi 0, %s26
    %s18 = sphi 0, %s15
    %s19 = sphi 0, %s16
    %s20 = sphi 0, %s17
    %s21 = sphi 0, %s18
    %s22 = sphi 0, %s19
    %s23 = sphi 0, %s20
    %s39 = sphi 0, %s41
    %s42 = sphi 0, %s39
    %s43 = sphi 0, %s42
    %s59 = sphi 0, %s43
    %s65 = sphi 0, %s67
    %s68 = sphi 0, %s65
    %s69 = sphi 0, %s68
    %s85 = sphi 0, %s69
    %s95 = sphi 0, %s97
    %s98 = sphi 0, %s95
    %s99 = sphi 0, %s98
    %s115 = sphi 0, %s99
  $region4: #{text_encoder_forward.13} parent=0 // loop_header_branch
    %11 = sbr.rel (%p9) target = $region8
  $region5: #{text_encoder_forward.13} parent=0 // loop_body
    %s13 = ssub.s32 %s8, 1
    %s14 = ssub.s32 %s8, 2
    %s24 = sadd.s32 1, %s17
    %p25 = scmp.ge.s32.totalorder %s24, 1
    %s26 = scalar_select %p25, 0, %s24
    %s27 = sadd.s32 1, %s16
    %s28 = scalar_select %p25, %s27, %s16
    %p29 = scmp.ge.s32.totalorder %s28, 1
    %s30 = scalar_select %p29, 0, %s28
    %s31 = sadd.s32 1, %s15
    %s32 = scalar_select %p29, %s31, %s15
    %p33 = scmp.ge.s32.totalorder %s32, 2
    %s34 = scalar_select %p33, 0, %s32
    %s35 = ssub.s32 %s15, %s34
    %s36 = ssub.s32 %s16, %s30
    %s37 = sor.u32 %s35, %s36
    %p38 = scmp.eq.s32.totalorder %s37, 0
    %s40 = sadd.s32 %s39, 1
    %s41 = scalar_select %p38, %s39, %s40
    %p44 = pneg %p38
    %p45 = scmp.eq.s32.totalorder %s8, 1
    %p46 = por %p44, %p45
    %p47 = scmp.ne.s32.totalorder %s39, %s42
    %p48 = scmp.eq.s32.totalorder %s8, 0
    %p49 = por %p47, %p48
    %p50 = scmp.ne.s32.totalorder %s39, %s42
    %p51 = scmp.eq.s32.totalorder %s13, 1
    %p52 = por %p50, %p51
    %p53 = scmp.ne.s32.totalorder %s42, %s43
    %p54 = scmp.eq.s32.totalorder %s13, 0
    %p55 = por %p53, %p54
    %p56 = scmp.ne.s32.totalorder %s42, %s43
    %p57 = scmp.eq.s32.totalorder %s14, 1
    %p58 = por %p56, %p57
    %p60 = scmp.ne.s32.totalorder %s43, %s59
    %p61 = scmp.eq.s32.totalorder %s14, 0
    %p62 = por %p60, %p61
    %s63 = ssub.s32 %s15, %s34
    %p64 = scmp.eq.s32.totalorder %s63, 0
    %s66 = sadd.s32 %s65, 1
    %s67 = scalar_select %p64, %s65, %s66
    %p70 = pneg %p64
    %p71 = scmp.eq.s32.totalorder %s8, 1
    %p72 = por %p70, %p71
    %p73 = scmp.ne.s32.totalorder %s65, %s68
    %p74 = scmp.eq.s32.totalorder %s8, 0
    %p75 = por %p73, %p74
    %p76 = scmp.ne.s32.totalorder %s65, %s68
    %p77 = scmp.eq.s32.totalorder %s13, 1
    %p78 = por %p76, %p77
    %p79 = scmp.ne.s32.totalorder %s68, %s69
    %p80 = scmp.eq.s32.totalorder %s13, 0
    %p81 = por %p79, %p80
    %p82 = scmp.ne.s32.totalorder %s68, %s69
    %p83 = scmp.eq.s32.totalorder %s14, 1
    %p84 = por %p82, %p83
    %p86 = scmp.ne.s32.totalorder %s69, %s85
    %p87 = scmp.eq.s32.totalorder %s14, 0
    %p88 = por %p86, %p87
    %s89 = ssub.s32 %s15, %s34
    %s90 = ssub.s32 %s17, %s26
    %s91 = sor.u32 %s89, %s90
    %s92 = ssub.s32 %s16, %s30
    %s93 = sor.u32 %s91, %s92
    %p94 = scmp.eq.s32.totalorder %s93, 0
    %s96 = sadd.s32 %s95, 1
    %s97 = scalar_select %p94, %s95, %s96
    %p100 = pneg %p94
    %p101 = scmp.eq.s32.totalorder %s8, 1
    %p102 = por %p100, %p101
    %p103 = scmp.ne.s32.totalorder %s95, %s98
    %p104 = scmp.eq.s32.totalorder %s8, 0
    %p105 = por %p103, %p104
    %p106 = scmp.ne.s32.totalorder %s95, %s98
    %p107 = scmp.eq.s32.totalorder %s13, 1
    %p108 = por %p106, %p107
    %p109 = scmp.ne.s32.totalorder %s98, %s99
    %p110 = scmp.eq.s32.totalorder %s13, 0
    %p111 = por %p109, %p110
    %p112 = scmp.ne.s32.totalorder %s98, %s99
    %p113 = scmp.eq.s32.totalorder %s14, 1
    %p114 = por %p112, %p113
    %p116 = scmp.ne.s32.totalorder %s99, %s115
    %p117 = scmp.eq.s32.totalorder %s14, 0
    %p118 = por %p116, %p117
    %p119 = scmp.le.s32.totalorder 1, %s8
    %p120 = scmp.lt.s32.totalorder %s8, 3
    %p121 = pnand %p119, %p120
    %p122 = pneg %p121
    // Predicated region
    $region9: #{text_encoder_forward.13} parent=5 // pred_check
      _
    $region10: #{text_encoder_forward.13} parent=5 // pred_check_branch
      %124 = sbr.rel (%p121) target = $region12
    $region11: #{text_encoder_forward.13} parent=5 // pred_region
      %s125 = ssub.s32 %s8, 1
    $region12: #{text_encoder_forward.13} parent=5 // pred_fallthru
      _
    %p126 = scmp.lt.s32.totalorder %s8, 2
    // Predicated region
    $region13: #{text_encoder_forward.13} parent=5 // pred_check
      %p127 = pneg %p126
    $region14: #{text_encoder_forward.13} parent=5 // pred_check_branch
      %129 = sbr.rel (%p127) target = $region16
    $region15: #{text_encoder_forward.13} parent=5 // pred_region
      // Predicated region
      $region17: #{text_encoder_forward.13} parent=15 // pred_check
        %p130 = pneg %p49
      $region18: #{text_encoder_forward.13} parent=15 // pred_check_branch
        %132 = sbr.rel (%p130) target = $region20
      $region19: #{text_encoder_forward.13} parent=15 // pred_region
        %p133 = scmp.lt.s32.totalorder %s15, 1
        %s134 = scalar_select %p133, %s15, 1
        %p135 = scmp.lt.s32.totalorder %s16, 0
        %s136 = scalar_select %p135, %s16, 0
        %s137 = sadd.s32 %s136, %s134
        %s138 = smul.addr %s137, 4
        %s139 = scalar_lea.vmem %s0, %s138
      $region20: #{text_encoder_forward.13} parent=15 // pred_fallthru
        _
      // Predicated region
      $region21: #{text_encoder_forward.13} parent=15 // pred_check
        %p140 = pneg %p75
      $region22: #{text_encoder_forward.13} parent=15 // pred_check_branch
        %142 = sbr.rel (%p140) target = $region24
      $region23: #{text_encoder_forward.13} parent=15 // pred_region
        %p143 = scmp.lt.s32.totalorder %s15, 1
        %s144 = scalar_select %p143, %s15, 1
        %s145 = scalar_lea.vmem %s1, %s144
      $region24: #{text_encoder_forward.13} parent=15 // pred_fallthru
        _
    $region16: #{text_encoder_forward.13} parent=5 // pred_fallthru
      _
    %p146 = scmp.le.s32.totalorder 1, %s8
    %p147 = scmp.lt.s32.totalorder %s8, 3
    %p148 = pnand %p146, %p147
    %p149 = pneg %p148
    // Predicated region
    $region25: #{text_encoder_forward.13} parent=5 // pred_check
      _
    $region26: #{text_encoder_forward.13} parent=5 // pred_check_branch
      %151 = sbr.rel (%p148) target = $region28
    $region27: #{text_encoder_forward.13} parent=5 // pred_region
      %s152 = ssub.s32 %s8, 1
      %p153 = scmp.lt.s32.totalorder %s18, 1
      %s154 = scalar_select %p153, %s18, 1
      %p155 = scmp.lt.s32.totalorder %s19, 0
      %s156 = scalar_select %p155, %s19, 0
      %s157 = sadd.s32 %s156, %s154
      %s158 = smul.addr %s157, 4
      %s159 = scalar_lea.vmem %s0, %s158
      %p160 = pneg %p55
      %p161 = pneg %p52
      %p162 = scmp.lt.s32.totalorder %s18, 1
      %s163 = scalar_select %p162, %s18, 1
      %s164 = scalar_lea.vmem %s1, %s163
      %p165 = pneg %p81
      %p166 = pneg %p78
      %p167 = pneg %p111
      %p168 = pneg %p108
      %p169 = scmp.lt.s32.totalorder %s18, 1
      %s170 = scalar_select %p169, %s18, 1
      %p171 = scmp.lt.s32.totalorder %s20, 0
      %s172 = scalar_select %p171, %s20, 0
      %p173 = scmp.lt.s32.totalorder %s19, 0
      %s174 = scalar_select %p173, %s19, 0
      %s175 = sadd.s32 %s174, %s172
      %s176 = sadd.s32 %s175, %s170
      %s177 = smul.addr %s176, 4
      %s178 = scalar_lea.vmem %s2, %s177
      %p179 = scmp.lt.s32.totalorder %s18, 1
      %s180 = scalar_select %p179, %s18, 1
      %p181 = scmp.lt.s32.totalorder %s19, 0
      %s182 = scalar_select %p181, %s19, 0
      %s183 = sadd.s32 %s182, %s180
      %s184 = smul.addr %s183, 4
      %s185 = scalar_lea.vmem %s0, %s184
      %p186 = scmp.lt.s32.totalorder %s18, 1
      %s187 = scalar_select %p186, %s18, 1
      %s188 = scalar_lea.vmem %s1, %s187
      %p189 = scmp.lt.s32.totalorder %s18, 1
      %s190 = scalar_select %p189, %s18, 1
      %p191 = scmp.lt.s32.totalorder %s20, 0
      %s192 = scalar_select %p191, %s20, 0
      %p193 = scmp.lt.s32.totalorder %s19, 0
      %s194 = scalar_select %p193, %s19, 0
      %s195 = sadd.s32 %s194, %s192
      %s196 = sadd.s32 %s195, %s190
      %s197 = smul.addr %s196, 4
      %s198 = scalar_lea.vmem %s2, %s197
      %s200 = smul.u32 %s20, 8
      %v201 = vld [vmem:[%s188] sm:$0x1]
      %s202 = sshra.s32 %s200, 3
      %s203 = sand.u32 %s200, 7
      %s204 = smul.addr %s202, 4
      %s205 = scalar_lea.vmem %s185, %s204
      %v206 = vld [vmem:[%s205] sm:$0xf]
      %v207 = vld [vmem:[%s185] sm:$0xf]
      %v209 = vlaneseq
      %v210 = vshrl.u32 %v209, 7
      %v211 = vsub.s32 0, %v210
      %v212 = vrot.slane %v201, %v211
      %v215 = vunpack.c.l.b16 %v207
      %v216 = vpack.c.b16 %v215, %v215
      %217 = vrot.lane.b32.xlu0 %v216, 96
      %v218 = vpop.permute.xlu0 %217
      %vm219 = vcmask 130048
      %v221 = vsel %vm219, %v206, 0
      %v224 = vsel %vm219, %v218, 0
      %226 = vmatprep.subr.bf16.mxu0 0
      %227 = vmatpush1.bf16.xpose.msra.mxu0 %v224
      %228 = vmatprep.subr.bf16.mxu0 0
      %229 = vmatpush1.bf16.xpose.msra.mxu0 0
      %230 = vmatprep.subr.bf16.mxu0 0
      %231 = vmatpush1.bf16.xpose.msra.mxu0 0
      %232 = vmatprep.subr.bf16.mxu0 0
      %233 = vmatpush1.bf16.xpose.msra.mxu0 0
      %234 = vmatprep.subr.bf16.mxu0 0
      %235 = vmatpush1.bf16.xpose.msra.mxu0 0
      %236 = vmatprep.subr.bf16.mxu0 0
      %237 = vmatpush1.bf16.xpose.msra.mxu0 0
      %238 = vmatprep.subr.bf16.mxu0 0
      %239 = vmatpush1.bf16.xpose.msra.mxu0 0
      %240 = vmatprep.subr.bf16.mxu0 0
      %241 = vmatpush1.bf16.xpose.msra.mxu0 0
      %242 = vmatprep.subr.bf16.mxu0 0
      %243 = vmatpush1.bf16.xpose.msra.mxu0 0
      %244 = vmatprep.subr.bf16.mxu0 0
      %245 = vmatpush1.bf16.xpose.msra.mxu0 0
      %246 = vmatprep.subr.bf16.mxu0 0
      %247 = vmatpush1.bf16.xpose.msra.mxu0 0
      %248 = vmatprep.subr.bf16.mxu0 0
      %249 = vmatpush1.bf16.xpose.msra.mxu0 0
      %250 = vmatprep.subr.bf16.mxu0 0
      %251 = vmatpush1.bf16.xpose.msra.mxu0 0
      %252 = vmatprep.subr.bf16.mxu0 0
      %253 = vmatpush1.bf16.xpose.msra.mxu0 0
      %254 = vmatprep.subr.bf16.mxu0 0
      %255 = vmatpush1.bf16.xpose.msra.mxu0 0
      %256 = vmatprep.subr.bf16.mxu0 0
      %257 = vmatpush1.bf16.xpose.msra.mxu0 0
      %258 = vmatprep.mubr.bf16.mxu0 0
      %259 = vmatmul.mubr.bf16.gmra.mrb[0].mxu0 %v221
      %v260 = vpop.f32.mrb[0].mxu0
      %v261 = vadd.f32 %v212, %v260
      %v262 = vpop.f32.mrb[0].mxu0
      %v263 = vpop.f32.mrb[0].mxu0
      %v264 = vpop.f32.mrb[0].mxu0
      %265 = vdwg.mxu0
      %vm266 = vcmask 64512
      %v267 = vsel %vm266, %v261, -inf
      %268 = vmax.xlane.f32.xlu0 %v267
      %v269 = vpop.xlane.xlu0 %268
      %v270 = vsub.f32 %v261, %v269
      %v271 = vmul.f32 %v270, 1.442695
      %v272 = vpow.pop %v271
      %v273 = vsel %vm266, %v272, 0.0
      %274 = vadd.xlane.f32.xlu0 %v273
      %v275 = vpop.xlane.xlu0 %274
      %v276 = vrcp.pop %v275
      %v277 = vmul.f32 %v272, %v276
      %v278 = vpack.c.bf16 %v277, %v277
      %279 = vrot.lane.b32.xlu0 %v216, 64
      %v280 = vpop.permute.xlu0 %279
      %v282 = vsel %vm266, %v278, 0
      %vm284 = vcmask 1043456
      %v286 = vsel %vm284, %v280, 0
      %288 = vmatprep.subr.bf16.mxu0 0
      %289 = vmatpush1.bf16.msra.mxu0 %v286
      %290 = vmatprep.subr.bf16.mxu0 0
      %291 = vmatpush1.bf16.msra.mxu0 0
      %292 = vmatprep.subr.bf16.mxu0 0
      %293 = vmatpush1.bf16.msra.mxu0 0
      %294 = vmatprep.subr.bf16.mxu0 0
      %295 = vmatpush1.bf16.msra.mxu0 0
      %296 = vmatprep.subr.bf16.mxu0 0
      %297 = vmatpush1.bf16.msra.mxu0 0
      %298 = vmatprep.subr.bf16.mxu0 0
      %299 = vmatpush1.bf16.msra.mxu0 0
      %300 = vmatprep.subr.bf16.mxu0 0
      %301 = vmatpush1.bf16.msra.mxu0 0
      %302 = vmatprep.subr.bf16.mxu0 0
      %303 = vmatpush1.bf16.msra.mxu0 0
      %304 = vmatprep.subr.bf16.mxu0 0
      %305 = vmatpush1.bf16.msra.mxu0 0
      %306 = vmatprep.subr.bf16.mxu0 0
      %307 = vmatpush1.bf16.msra.mxu0 0
      %308 = vmatprep.subr.bf16.mxu0 0
      %309 = vmatpush1.bf16.msra.mxu0 0
      %310 = vmatprep.subr.bf16.mxu0 0
      %311 = vmatpush1.bf16.msra.mxu0 0
      %312 = vmatprep.subr.bf16.mxu0 0
      %313 = vmatpush1.bf16.msra.mxu0 0
      %314 = vmatprep.subr.bf16.mxu0 0
      %315 = vmatpush1.bf16.msra.mxu0 0
      %316 = vmatprep.subr.bf16.mxu0 0
      %317 = vmatpush1.bf16.msra.mxu0 0
      %318 = vmatprep.subr.bf16.mxu0 0
      %319 = vmatpush1.bf16.msra.mxu0 0
      %320 = vmatprep.mubr.bf16.mxu0 0
      %321 = vmatmul.mubr.bf16.gmra.mrb[0].mxu0 %v282
      %v322 = vpop.f32.mrb[0].mxu0
      %v323 = vadd.f32 0.0, %v322
      %v324 = vpop.f32.mrb[0].mxu0
      %v325 = vpop.f32.mrb[0].mxu0
      %v326 = vpop.f32.mrb[0].mxu0
      %327 = vdwg.mxu0
      %v329 = vunpack.c.l.b16 %v206
      %v330 = vpack.c.b16 %v329, %v329
      %331 = vrot.lane.b32.xlu0 %v330, 112
      %v332 = vpop.permute.xlu0 %331
      %333 = vrot.lane.b32.xlu0 %v216, 80
      %v334 = vpop.permute.xlu0 %333
      %v336 = vsel %vm219, %v332, 0
      %v339 = vsel %vm219, %v334, 0
      %341 = vmatprep.subr.bf16.mxu0 0
      %342 = vmatpush1.bf16.xpose.msra.mxu0 %v339
      %343 = vmatprep.subr.bf16.mxu0 0
      %344 = vmatpush1.bf16.xpose.msra.mxu0 0
      %345 = vmatprep.subr.bf16.mxu0 0
      %346 = vmatpush1.bf16.xpose.msra.mxu0 0
      %347 = vmatprep.subr.bf16.mxu0 0
      %348 = vmatpush1.bf16.xpose.msra.mxu0 0
      %349 = vmatprep.subr.bf16.mxu0 0
      %350 = vmatpush1.bf16.xpose.msra.mxu0 0
      %351 = vmatprep.subr.bf16.mxu0 0
      %352 = vmatpush1.bf16.xpose.msra.mxu0 0
      %353 = vmatprep.subr.bf16.mxu0 0
      %354 = vmatpush1.bf16.xpose.msra.mxu0 0
      %355 = vmatprep.subr.bf16.mxu0 0
      %356 = vmatpush1.bf16.xpose.msra.mxu0 0
      %357 = vmatprep.subr.bf16.mxu0 0
      %358 = vmatpush1.bf16.xpose.msra.mxu0 0
      %359 = vmatprep.subr.bf16.mxu0 0
      %360 = vmatpush1.bf16.xpose.msra.mxu0 0
      %361 = vmatprep.subr.bf16.mxu0 0
      %362 = vmatpush1.bf16.xpose.msra.mxu0 0
      %363 = vmatprep.subr.bf16.mxu0 0
      %364 = vmatpush1.bf16.xpose.msra.mxu0 0
      %365 = vmatprep.subr.bf16.mxu0 0
      %366 = vmatpush1.bf16.xpose.msra.mxu0 0
      %367 = vmatprep.subr.bf16.mxu0 0
      %368 = vmatpush1.bf16.xpose.msra.mxu0 0
      %369 = vmatprep.subr.bf16.mxu0 0
      %370 = vmatpush1.bf16.xpose.msra.mxu0 0
      %371 = vmatprep.subr.bf16.mxu0 0
      %372 = vmatpush1.bf16.xpose.msra.mxu0 0
      %373 = vmatprep.mubr.bf16.mxu0 0
      %374 = vmatmul.mubr.bf16.gmra.mrb[0].mxu0 %v336
      %v375 = vpop.f32.mrb[0].mxu0
      %v376 = vadd.f32 %v212, %v375
      %v377 = vpop.f32.mrb[0].mxu0
      %v378 = vpop.f32.mrb[0].mxu0
      %v379 = vpop.f32.mrb[0].mxu0
      %380 = vdwg.mxu0
      %v381 = vsel %vm266, %v376, -inf
      %382 = vmax.xlane.f32.xlu0 %v381
      %v383 = vpop.xlane.xlu0 %382
      %v384 = vsub.f32 %v376, %v383
      %v385 = vmul.f32 %v384, 1.442695
      %v386 = vpow.pop %v385
      %v387 = vsel %vm266, %v386, 0.0
      %388 = vadd.xlane.f32.xlu0 %v387
      %v389 = vpop.xlane.xlu0 %388
      %v390 = vrcp.pop %v389
      %v391 = vmul.f32 %v386, %v390
      %v392 = vpack.c.bf16 %v391, %v391
      %393 = vrot.lane.b32.xlu0 %v216, 48
      %v394 = vpop.permute.xlu0 %393
      %v396 = vsel %vm266, %v392, 0
      %v399 = vsel %vm284, %v394, 0
      %401 = vmatprep.subr.bf16.mxu0 0
      %402 = vmatpush1.bf16.msra.mxu0 %v399
      %403 = vmatprep.subr.bf16.mxu0 0
      %404 = vmatpush1.bf16.msra.mxu0 0
      %405 = vmatprep.subr.bf16.mxu0 0
      %406 = vmatpush1.bf16.msra.mxu0 0
      %407 = vmatprep.subr.bf16.mxu0 0
      %408 = vmatpush1.bf16.msra.mxu0 0
      %409 = vmatprep.subr.bf16.mxu0 0
      %410 = vmatpush1.bf16.msra.mxu0 0
      %411 = vmatprep.subr.bf16.mxu0 0
      %412 = vmatpush1.bf16.msra.mxu0 0
      %413 = vmatprep.subr.bf16.mxu0 0
      %414 = vmatpush1.bf16.msra.mxu0 0
      %415 = vmatprep.subr.bf16.mxu0 0
      %416 = vmatpush1.bf16.msra.mxu0 0
      %417 = vmatprep.subr.bf16.mxu0 0
      %418 = vmatpush1.bf16.msra.mxu0 0
      %419 = vmatprep.subr.bf16.mxu0 0
      %420 = vmatpush1.bf16.msra.mxu0 0
      %421 = vmatprep.subr.bf16.mxu0 0
      %422 = vmatpush1.bf16.msra.mxu0 0
      %423 = vmatprep.subr.bf16.mxu0 0
      %424 = vmatpush1.bf16.msra.mxu0 0
      %425 = vmatprep.subr.bf16.mxu0 0
      %426 = vmatpush1.bf16.msra.mxu0 0
      %427 = vmatprep.subr.bf16.mxu0 0
      %428 = vmatpush1.bf16.msra.mxu0 0
      %429 = vmatprep.subr.bf16.mxu0 0
      %430 = vmatpush1.bf16.msra.mxu0 0
      %431 = vmatprep.subr.bf16.mxu0 0
      %432 = vmatpush1.bf16.msra.mxu0 0
      %433 = vmatprep.mubr.bf16.mxu0 0
      %434 = vmatmul.mubr.bf16.gmra.mrb[0].mxu0 %v396
      %v435 = vpop.f32.mrb[0].mxu0
      %v436 = vadd.f32 0.0, %v435
      %v437 = vpop.f32.mrb[0].mxu0
      %v438 = vpop.f32.mrb[0].mxu0
      %v439 = vpop.f32.mrb[0].mxu0
      %440 = vdwg.mxu0
      %442 = vrot.lane.b32.xlu0 %v436, 16
      %v443 = vpop.permute.xlu0 %442
      %v445 = vsel %vm219, %v323, %v443
      %v446 = vpack.c.bf16 %v445, %v445
      %vm447 = vcmask 257024
      %448 = vst.msk [vmem:[%s198] sm:$0xf] %vm447, %v446
      %p449 = scmp.lt.s32.totalorder %s18, 1
      %s450 = scalar_select %p449, %s18, 1
      %p451 = scmp.lt.s32.totalorder %s20, 0
      %s452 = scalar_select %p451, %s20, 0
      %p453 = scmp.lt.s32.totalorder %s19, 0
      %s454 = scalar_select %p453, %s19, 0
      %s455 = sadd.s32 %s454, %s452
      %s456 = sadd.s32 %s455, %s450
      %s457 = smul.addr %s456, 4
      %s458 = scalar_lea.vmem %s2, %s457
      // Predicated region
      $region29: #{text_encoder_forward.13} parent=27 // pred_check
        %p459 = pneg %p108
      $region30: #{text_encoder_forward.13} parent=27 // pred_check_branch
        %461 = sbr.rel (%p459) target = $region32
      $region31: #{text_encoder_forward.13} parent=27 // pred_region
        _
      $region32: #{text_encoder_forward.13} parent=27 // pred_fallthru
        _
    $region28: #{text_encoder_forward.13} parent=5 // pred_fallthru
      _
    %p462 = scmp.le.s32.totalorder 2, %s8
    // Predicated region
    $region33: #{text_encoder_forward.13} parent=5 // pred_check
      %p463 = pneg %p462
    $region34: #{text_encoder_forward.13} parent=5 // pred_check_branch
      %465 = sbr.rel (%p463) target = $region36
    $region35: #{text_encoder_forward.13} parent=5 // pred_region
      %s466 = ssub.s32 %s8, 2
      // Predicated region
      $region37: #{text_encoder_forward.13} parent=35 // pred_check
        %p467 = pneg %p114
      $region38: #{text_encoder_forward.13} parent=35 // pred_check_branch
        %469 = sbr.rel (%p467) target = $region40
      $region39: #{text_encoder_forward.13} parent=35 // pred_region
        %p470 = scmp.lt.s32.totalorder %s21, 1
        %s471 = scalar_select %p470, %s21, 1
        %p472 = scmp.lt.s32.totalorder %s23, 0
        %s473 = scalar_select %p472, %s23, 0
        %p474 = scmp.lt.s32.totalorder %s22, 0
        %s475 = scalar_select %p474, %s22, 0
        %s476 = sadd.s32 %s475, %s473
        %s477 = sadd.s32 %s476, %s471
        %s478 = smul.addr %s477, 4
        %s479 = scalar_lea.vmem %s2, %s478
      $region40: #{text_encoder_forward.13} parent=35 // pred_fallthru
        _
    $region36: #{text_encoder_forward.13} parent=5 // pred_fallthru
      _
  $region6: #{text_encoder_forward.13} parent=0 // loop_footer
    %s12 = sadd.s32 1, %s8
  $region7: #{text_encoder_forward.13} parent=0 // loop_footer_branch
    %7 = sbr.rel target = $region3
  $region8: #{text_encoder_forward.13} parent=0 // loop_exit
    _

// kernel: text_encoder_forward.14
$region0: #{text_encoder_forward.14}
  #allocation0 [shape = 'u32[]', space=smem, size = 0x4, offset = 0x4, fixed_abs, tag = 'smem constant byte address 0x4 - core index']
  #allocation1 [shape = 'u32[144,128]{1,0:T(1,128)}', space=vmem, size = 0x12000, scoped, tag = 'internal scratch']
  #allocation2 [shape = 'f32[16,32]{1,0:T(8,128)}', space=vmem, size = 0x2000, scoped, tag = 'scratch operand']
  %s0 = inlined_call_operand.vmem [shape: bf16[16,32], index: 0, kind: input, shape index: {}]
  %s1 = inlined_call_operand.vmem [shape: bf16[32,32], index: 1, kind: input, shape index: {}]
  %s2 = inlined_call_operand.vmem [shape: f32[1,32], index: 2, kind: input, shape index: {}]
  %s3 = inlined_call_operand.vmem [shape: bf16[16,32], index: 3, kind: input, shape index: {}]
  %s4 = inlined_call_operand.vmem [shape: f32[1,32], index: 4, kind: input, shape index: {}]
  %s5 = inlined_call_operand.vmem [shape: f32[1,32], index: 5, kind: input, shape index: {}]
  %s6 = inlined_call_operand.vmem [shape: bf16[16,32], index: 6, kind: output, shape index: {}]
  %s7 = sld [smem:[#allocation0]]
  $region42: #{text_encoder_forward.14} parent=0
    _
  %s9 = ssub.s32 1, %s7
  %s10 = scalar_select 0, %s9, %s7
  // Predicated region
  $region2: #{text_encoder_forward.14} parent=0 // pred_check
    _
  $region3: #{text_encoder_forward.14} parent=0 // pred_check_branch
    %12 = sbr.rel (0) target = $region5
  $region4: #{text_encoder_forward.14} parent=0 // pred_region
    _
  $region5: #{text_encoder_forward.14} parent=0 // pred_fallthru
    _
  // Predicated region
  $region6: #{text_encoder_forward.14} parent=0 // pred_check
    _
  $region7: #{text_encoder_forward.14} parent=0 // pred_check_branch
    %14 = sbr.rel (0) target = $region9
  $region8: #{text_encoder_forward.14} parent=0 // pred_region
    _
  $region9: #{text_encoder_forward.14} parent=0 // pred_fallthru
    _
  // Predicated region
  $region10: #{text_encoder_forward.14} parent=0 // pred_check
    _
  $region11: #{text_encoder_forward.14} parent=0 // pred_check_branch
    %16 = sbr.rel (0) target = $region13
  $region12: #{text_encoder_forward.14} parent=0 // pred_region
    _
  $region13: #{text_encoder_forward.14} parent=0 // pred_fallthru
    _
  // Predicated region
  $region14: #{text_encoder_forward.14} parent=0 // pred_check
    _
  $region15: #{text_encoder_forward.14} parent=0 // pred_check_branch
    %18 = sbr.rel (0) target = $region17
  $region16: #{text_encoder_forward.14} parent=0 // pred_region
    _
  $region17: #{text_encoder_forward.14} parent=0 // pred_fallthru
    _
  // Predicated region
  $region18: #{text_encoder_forward.14} parent=0 // pred_check
    _
  $region19: #{text_encoder_forward.14} parent=0 // pred_check_branch
    %20 = sbr.rel (0) target = $region21
  $region20: #{text_encoder_forward.14} parent=0 // pred_region
    _
  $region21: #{text_encoder_forward.14} parent=0 // pred_fallthru
    _
  // Predicated region
  $region22: #{text_encoder_forward.14} parent=0 // pred_check
    _
  $region23: #{text_encoder_forward.14} parent=0 // pred_check_branch
    %22 = sbr.rel (0) target = $region25
  $region24: #{text_encoder_forward.14} parent=0 // pred_region
    _
  $region25: #{text_encoder_forward.14} parent=0 // pred_fallthru
    _
  %p24 = scmp.eq.s32.totalorder 0, 0
  // Predicated region
  $region26: #{text_encoder_forward.14} parent=0 // pred_check
    %p25 = pneg %p24
  $region27: #{text_encoder_forward.14} parent=0 // pred_check_branch
    %27 = sbr.rel (%p25) target = $region29
  $region28: #{text_encoder_forward.14} parent=0 // pred_region
    %vm28 = vcmask 261120
    %29 = vst.msk [vmem:[#allocation2] sm:$0xff] %vm28, 0.0
    %30 = vst.msk [vmem:[#allocation2 + $0x8] sm:$0xff] %vm28, 0.0
  $region29: #{text_encoder_forward.14} parent=0 // pred_fallthru
    _
  %v31 = vld [vmem:[#allocation2] sm:$0xff]
  %v32 = vld [vmem:[#allocation2 + $0x8] sm:$0xff]
  %v33 = vld [vmem:[%s0] sm:$0xf]
  %v34 = vld [vmem:[%s0 + $0x4] sm:$0xf]
  %v35 = vld [vmem:[%s1] sm:$0xf]
  %v36 = vld [vmem:[%s1 + $0x4] sm:$0xf]
  %v37 = vld [vmem:[%s1 + $0x8] sm:$0xf]
  %v38 = vld [vmem:[%s1 + $0xc] sm:$0xf]
  %v41 = vunpack.c.l.b16 %v33
  %v42 = vunpack.c.l.b16 %v34
  %v43 = vpack.c.b16 %v42, %v41
  %v48 = vunpack.c.l.b16 %v35
  %v49 = vunpack.c.l.b16 %v36
  %v50 = vunpack.c.l.b16 %v37
  %v51 = vunpack.c.l.b16 %v38
  %v52 = vpack.c.b16 %v49, %v48
  %v53 = vpack.c.b16 %v51, %v50
  %vm56 = vcmask 261120
  %v58 = vsel %vm56, %v43, 0
  %60 = vmatprep.subr.bf16.mxu0 0
  %61 = vmatpush1.bf16.msra.mxu0 %v52
  %62 = vmatprep.subr.bf16.mxu0 0
  %63 = vmatpush1.bf16.msra.mxu0 %v53
  %64 = vmatprep.subr.bf16.mxu0 0
  %65 = vmatpush1.bf16.msra.mxu0 0
  %66 = vmatprep.subr.bf16.mxu0 0
  %67 = vmatpush1.bf16.msra.mxu0 0
  %68 = vmatprep.subr.bf16.mxu0 0
  %69 = vmatpush1.bf16.msra.mxu0 0
  %70 = vmatprep.subr.bf16.mxu0 0
  %71 = vmatpush1.bf16.msra.mxu0 0
  %72 = vmatprep.subr.bf16.mxu0 0
  %73 = vmatpush1.bf16.msra.mxu0 0
  %74 = vmatprep.subr.bf16.mxu0 0
  %75 = vmatpush1.bf16.msra.mxu0 0
  %76 = vmatprep.subr.bf16.mxu0 0
  %77 = vmatpush1.bf16.msra.mxu0 0
  %78 = vmatprep.subr.bf16.mxu0 0
  %79 = vmatpush1.bf16.msra.mxu0 0
  %80 = vmatprep.subr.bf16.mxu0 0
  %81 = vmatpush1.bf16.msra.mxu0 0
  %82 = vmatprep.subr.bf16.mxu0 0
  %83 = vmatpush1.bf16.msra.mxu0 0
  %84 = vmatprep.subr.bf16.mxu0 0
  %85 = vmatpush1.bf16.msra.mxu0 0
  %86 = vmatprep.subr.bf16.mxu0 0
  %87 = vmatpush1.bf16.msra.mxu0 0
  %88 = vmatprep.subr.bf16.mxu0 0
  %89 = vmatpush1.bf16.msra.mxu0 0
  %90 = vmatprep.subr.bf16.mxu0 0
  %91 = vmatpush1.bf16.msra.mxu0 0
  %92 = vmatprep.mubr.bf16.mxu0 0
  %93 = vmatmul.mubr.bf16.gmra.mrb[0].mxu0 %v58
  %v94 = vpop.f32.mrb[0].mxu0
  %v95 = vadd.f32 0.0, %v94
  %v96 = vpop.f32.mrb[0].mxu0
  %v97 = vpop.f32.mrb[0].mxu0
  %v98 = vadd.f32 0.0, %v97
  %v99 = vpop.f32.mrb[0].mxu0
  %100 = vdwg.mxu0
  %v101 = vadd.f32 %v31, %v95
  %v102 = vadd.f32 %v32, %v98
  %103 = vst.msk [vmem:[#allocation2] sm:$0xff] %vm56, %v101
  %104 = vst.msk [vmem:[#allocation2 + $0x8] sm:$0xff] %vm56, %v102
  // Predicated region
  $region30: #{text_encoder_forward.14} parent=0 // pred_check
    %p105 = pneg %p24
  $region31: #{text_encoder_forward.14} parent=0 // pred_check_branch
    %107 = sbr.rel (%p105) target = $region33
  $region32: #{text_encoder_forward.14} parent=0 // pred_region
    %v108 = vld [vmem:[#allocation2] sm:$0xff]
    %v109 = vld [vmem:[#allocation2 + $0x8] sm:$0xff]
    %v110 = vld [vmem:[%s2] sm:$0x1]
    %v112 = vlaneseq
    %v113 = vshrl.u32 %v112, 7
    %v114 = vsub.s32 0, %v113
    %v115 = vrot.slane %v110, %v114
    %v117 = vadd.f32 %v108, %v115
    %v118 = vadd.f32 %v109, %v115
    %v119 = vld [vmem:[%s3] sm:$0xf]
    %v120 = vld [vmem:[%s3 + $0x4] sm:$0xf]
    %v121 = vunpack.c.l.bf16 %v119
    %v122 = vunpack.c.l.bf16 %v120
    %v123 = vadd.f32 %v117, %v121
    %v124 = vadd.f32 %v118, %v122
    %v125 = vsel %vm56, %v123, 0.0
    %126 = vadd.xlane.f32.xlu0 %v125
    %v127 = vpop.xlane.xlu0 %126
    %v128 = vsel %vm56, %v124, 0.0
    %129 = vadd.xlane.f32.xlu0 %v128
    %v130 = vpop.xlane.xlu0 %129
    %v131 = vrcp.pop 32.0
    %v132 = vmul.f32 %v127, %v131
    %v133 = vmul.f32 %v130, %v131
    %v134 = vsub.f32 %v123, %v132
    %v135 = vsub.f32 %v124, %v133
    %v136 = vmul.f32 %v134, %v134
    %v137 = vmul.f32 %v135, %v135
    %v138 = vsel %vm56, %v136, 0.0
    %139 = vadd.xlane.f32.xlu0 %v138
    %v140 = vpop.xlane.xlu0 %139
    %v141 = vsel %vm56, %v137, 0.0
    %142 = vadd.xlane.f32.xlu0 %v141
    %v143 = vpop.xlane.xlu0 %142
    %v144 = vmul.f32 %v140, %v131
    %v145 = vmul.f32 %v143, %v131
    %v146 = vadd.f32 %v144, 1e-12
    %v147 = vadd.f32 %v145, 1e-12
    %v148 = vrsqrt.pop %v146
    %v149 = vrsqrt.pop %v147
    %v150 = vmul.f32 %v134, %v148
    %v151 = vmul.f32 %v135, %v149
    %v152 = vld [vmem:[%s4] sm:$0x1]
    %v154 = vlaneseq
    %v155 = vshrl.u32 %v154, 7
    %v156 = vsub.s32 0, %v155
    %v157 = vrot.slane %v152, %v156
    %v159 = vmul.f32 %v150, %v157
    %v160 = vmul.f32 %v151, %v157
    %v161 = vld [vmem:[%s5] sm:$0x1]
    %v163 = vlaneseq
    %v164 = vshrl.u32 %v163, 7
    %v165 = vsub.s32 0, %v164
    %v166 = vrot.slane %v161, %v165
    %v168 = vadd.f32 %v159, %v166
    %v169 = vadd.f32 %v160, %v166
    %v170 = vpack.c.bf16 %v169, %v168
    %v172 = vunpack.c.l.b16 %v170
    %v173 = vunpack.c.h.b16 %v170
    %v174 = vpack.c.b16 %v172, %v172
    %v175 = vpack.c.b16 %v173, %v173
    %vm178 = vcmask 257024
    %179 = vst.msk [vmem:[%s6] sm:$0xf] %vm178, %v174
    %180 = vst.msk [vmem:[%s6 + $0x4] sm:$0xf] %vm178, %v175
  $region33: #{text_encoder_forward.14} parent=0 // pred_fallthru
    _
  // Predicated region
  $region34: #{text_encoder_forward.14} parent=0 // pred_check
    _
  $region35: #{text_encoder_forward.14} parent=0 // pred_check_branch
    %182 = sbr.rel (0) target = $region37
  $region36: #{text_encoder_forward.14} parent=0 // pred_region
    _
  $region37: #{text_encoder_forward.14} parent=0 // pred_fallthru
    _
  // Predicated region
  $region38: #{text_encoder_forward.14} parent=0 // pred_check
    _
  $region39: #{text_encoder_forward.14} parent=0 // pred_check_branch
    %184 = sbr.rel (0) target = $region41
  $region40: #{text_encoder_forward.14} parent=0 // pred_region
    _
  $region41: #{text_encoder_forward.14} parent=0 // pred_fallthru
    _

// kernel: text_encoder_forward.15
$region0: #{text_encoder_forward.15}
  #allocation0 [shape = 'u32[]', space=smem, size = 0x4, offset = 0x4, fixed_abs, tag = 'smem constant byte address 0x4 - core index']
  #allocation1 [shape = 'u32[144,128]{1,0:T(1,128)}', space=vmem, size = 0x12000, scoped, tag = 'internal scratch']
  #allocation2 [shape = 'f32[16,64]{1,0:T(8,128)}', space=vmem, size = 0x2000, scoped, tag = 'scratch operand']
  %s0 = inlined_call_operand.vmem [shape: bf16[16,32], index: 0, kind: input, shape index: {}]
  %s1 = inlined_call_operand.vmem [shape: bf16[32,64], index: 1, kind: input, shape index: {}]
  %s2 = inlined_call_operand.vmem [shape: f32[1,64], index: 2, kind: input, shape index: {}]
  %s3 = inlined_call_operand.vmem [shape: bf16[16,64], index: 3, kind: output, shape index: {}]
  %s4 = sld [smem:[#allocation0]]
  $region30: #{text_encoder_forward.15} parent=0
    _
  %s6 = ssub.s32 1, %s4
  %s7 = scalar_select 0, %s6, %s4
  // Predicated region
  $region2: #{text_encoder_forward.15} parent=0 // pred_check
    _
  $region3: #{text_encoder_forward.15} parent=0 // pred_check_branch
    %9 = sbr.rel (0) target = $region5
  $region4: #{text_encoder_forward.15} parent=0 // pred_region
    _
  $region5: #{text_encoder_forward.15} parent=0 // pred_fallthru
    _
  // Predicated region
  $region6: #{text_encoder_forward.15} parent=0 // pred_check
    _
  $region7: #{text_encoder_forward.15} parent=0 // pred_check_branch
    %11 = sbr.rel (0) target = $region9
  $region8: #{text_encoder_forward.15} parent=0 // pred_region
    _
  $region9: #{text_encoder_forward.15} parent=0 // pred_fallthru
    _
  // Predicated region
  $region10: #{text_encoder_forward.15} parent=0 // pred_check
    _
  $region11: #{text_encoder_forward.15} parent=0 // pred_check_branch
    %13 = sbr.rel (0) target = $region13
  $region12: #{text_encoder_forward.15} parent=0 // pred_region
    _
  $region13: #{text_encoder_forward.15} parent=0 // pred_fallthru
    _
  %p15 = scmp.eq.s32.totalorder 0, 0
  // Predicated region
  $region14: #{text_encoder_forward.15} parent=0 // pred_check
    %p16 = pneg %p15
  $region15: #{text_encoder_forward.15} parent=0 // pred_check_branch
    %18 = sbr.rel (%p16) target = $region17
  $region16: #{text_encoder_forward.15} parent=0 // pred_region
    %vm19 = vcmask 523264
    %20 = vst.msk [vmem:[#allocation2] sm:$0xff] %vm19, 0.0
    %21 = vst.msk [vmem:[#allocation2 + $0x8] sm:$0xff] %vm19, 0.0
  $region17: #{text_encoder_forward.15} parent=0 // pred_fallthru
    _
  %v22 = vld [vmem:[#allocation2] sm:$0xff]
  %v23 = vld [vmem:[#allocation2 + $0x8] sm:$0xff]
  %v24 = vld [vmem:[%s0] sm:$0xf]
  %v25 = vld [vmem:[%s0 + $0x4] sm:$0xf]
  %v26 = vld [vmem:[%s1] sm:$0xf]
  %v27 = vld [vmem:[%s1 + $0x4] sm:$0xf]
  %v28 = vld [vmem:[%s1 + $0x8] sm:$0xf]
  %v29 = vld [vmem:[%s1 + $0xc] sm:$0xf]
  %v32 = vunpack.c.l.b16 %v24
  %v33 = vunpack.c.l.b16 %v25
  %v34 = vpack.c.b16 %v33, %v32
  %v39 = vunpack.c.l.b16 %v26
  %v40 = vunpack.c.l.b16 %v27
  %v41 = vunpack.c.l.b16 %v28
  %v42 = vunpack.c.l.b16 %v29
  %v43 = vpack.c.b16 %v40, %v39
  %v44 = vpack.c.b16 %v42, %v41
  %vm47 = vcmask 261120
  %v49 = vsel %vm47, %v34, 0
  %51 = vmatprep.subr.bf16.mxu0 0
  %52 = vmatpush1.bf16.msra.mxu0 %v43
  %53 = vmatprep.subr.bf16.mxu0 0
  %54 = vmatpush1.bf16.msra.mxu0 %v44
  %55 = vmatprep.subr.bf16.mxu0 0
  %56 = vmatpush1.bf16.msra.mxu0 0
  %57 = vmatprep.subr.bf16.mxu0 0
  %58 = vmatpush1.bf16.msra.mxu0 0
  %59 = vmatprep.subr.bf16.mxu0 0
  %60 = vmatpush1.bf16.msra.mxu0 0
  %61 = vmatprep.subr.bf16.mxu0 0
  %62 = vmatpush1.bf16.msra.mxu0 0
  %63 = vmatprep.subr.bf16.mxu0 0
  %64 = vmatpush1.bf16.msra.mxu0 0
  %65 = vmatprep.subr.bf16.mxu0 0
  %66 = vmatpush1.bf16.msra.mxu0 0
  %67 = vmatprep.subr.bf16.mxu0 0
  %68 = vmatpush1.bf16.msra.mxu0 0
  %69 = vmatprep.subr.bf16.mxu0 0
  %70 = vmatpush1.bf16.msra.mxu0 0
  %71 = vmatprep.subr.bf16.mxu0 0
  %72 = vmatpush1.bf16.msra.mxu0 0
  %73 = vmatprep.subr.bf16.mxu0 0
  %74 = vmatpush1.bf16.msra.mxu0 0
  %75 = vmatprep.subr.bf16.mxu0 0
  %76 = vmatpush1.bf16.msra.mxu0 0
  %77 = vmatprep.subr.bf16.mxu0 0
  %78 = vmatpush1.bf16.msra.mxu0 0
  %79 = vmatprep.subr.bf16.mxu0 0
  %80 = vmatpush1.bf16.msra.mxu0 0
  %81 = vmatprep.subr.bf16.mxu0 0
  %82 = vmatpush1.bf16.msra.mxu0 0
  %83 = vmatprep.mubr.bf16.mxu0 0
  %84 = vmatmul.mubr.bf16.gmra.mrb[0].mxu0 %v49
  %v85 = vpop.f32.mrb[0].mxu0
  %v86 = vadd.f32 0.0, %v85
  %v87 = vpop.f32.mrb[0].mxu0
  %v88 = vpop.f32.mrb[0].mxu0
  %v89 = vadd.f32 0.0, %v88
  %v90 = vpop.f32.mrb[0].mxu0
  %91 = vdwg.mxu0
  %v92 = vadd.f32 %v22, %v86
  %v93 = vadd.f32 %v23, %v89
  %vm94 = vcmask 523264
  %95 = vst.msk [vmem:[#allocation2] sm:$0xff] %vm94, %v92
  %96 = vst.msk [vmem:[#allocation2 + $0x8] sm:$0xff] %vm94, %v93
  // Predicated region
  $region18: #{text_encoder_forward.15} parent=0 // pred_check
    %p97 = pneg %p15
  $region19: #{text_encoder_forward.15} parent=0 // pred_check_branch
    %99 = sbr.rel (%p97) target = $region21
  $region20: #{text_encoder_forward.15} parent=0 // pred_region
    %v100 = vld [vmem:[#allocation2] sm:$0xff]
    %v101 = vld [vmem:[#allocation2 + $0x8] sm:$0xff]
    %v102 = vld [vmem:[%s2] sm:$0x1]
    %v104 = vlaneseq
    %v105 = vshrl.u32 %v104, 7
    %v106 = vsub.s32 0, %v105
    %v107 = vrot.slane %v102, %v106
    %v109 = vadd.f32 %v100, %v107
    %v110 = vadd.f32 %v101, %v107
    %v111 = vmul.f32 %v109, 0.5
    %v112 = vmul.f32 %v110, 0.5
    %v113 = vmul.f32 %v109, 0.044715
    %v114 = vmul.f32 %v110, 0.044715
    %v115 = vmul.f32 %v113, %v109
    %v116 = vmul.f32 %v114, %v110
    %v117 = vmul.f32 %v115, %v109
    %v118 = vmul.f32 %v116, %v110
    %v119 = vadd.f32 %v109, %v117
    %v120 = vadd.f32 %v110, %v118
    %v121 = vmul.f32 %v119, 0.7978846
    %v122 = vmul.f32 %v120, 0.7978846
    %v123 = vtanh.pop %v121
    %v124 = vtanh.pop %v122
    %v125 = vadd.f32 %v123, 1.0
    %v126 = vadd.f32 %v124, 1.0
    %v127 = vmul.f32 %v111, %v125
    %v128 = vmul.f32 %v112, %v126
    %v129 = vpack.c.bf16 %v128, %v127
    %v131 = vunpack.c.l.b16 %v129
    %v132 = vunpack.c.h.b16 %v129
    %v133 = vpack.c.b16 %v131, %v131
    %v134 = vpack.c.b16 %v132, %v132
    %vm137 = vcmask 519168
    %138 = vst.msk [vmem:[%s3] sm:$0xf] %vm137, %v133
    %139 = vst.msk [vmem:[%s3 + $0x4] sm:$0xf] %vm137, %v134
  $region21: #{text_encoder_forward.15} parent=0 // pred_fallthru
    _
  // Predicated region
  $region22: #{text_encoder_forward.15} parent=0 // pred_check
    _
  $region23: #{text_encoder_forward.15} parent=0 // pred_check_branch
    %141 = sbr.rel (0) target = $region25
  $region24: #{text_encoder_forward.15} parent=0 // pred_region
    _
  $region25: #{text_encoder_forward.15} parent=0 // pred_fallthru
    _
  // Predicated region
  $region26: #{text_encoder_forward.15} parent=0 // pred_check
    _
  $region27: #{text_encoder_forward.15} parent=0 // pred_check_branch
    %143 = sbr.rel (0) target = $region29
  $region28: #{text_encoder_forward.15} parent=0 // pred_region
    _
  $region29: #{text_encoder_forward.15} parent=0 // pred_fallthru
    _

// kernel: text_encoder_forward.16
$region0: #{text_encoder_forward.16}
  #allocation0 [shape = 'u32[]', space=smem, size = 0x4, offset = 0x4, fixed_abs, tag = 'smem constant byte address 0x4 - core index']
  #allocation1 [shape = 'u32[144,128]{1,0:T(1,128)}', space=vmem, size = 0x12000, scoped, tag = 'internal scratch']
  #allocation2 [shape = 'f32[16,32]{1,0:T(8,128)}', space=vmem, size = 0x2000, scoped, tag = 'scratch operand']
  %s0 = inlined_call_operand.vmem [shape: bf16[16,64], index: 0, kind: input, shape index: {}]
  %s1 = inlined_call_operand.vmem [shape: bf16[64,32], index: 1, kind: input, shape index: {}]
  %s2 = inlined_call_operand.vmem [shape: f32[1,32], index: 2, kind: input, shape index: {}]
  %s3 = inlined_call_operand.vmem [shape: bf16[16,32], index: 3, kind: input, shape index: {}]
  %s4 = inlined_call_operand.vmem [shape: f32[1,32], index: 4, kind: input, shape index: {}]
  %s5 = inlined_call_operand.vmem [shape: f32[1,32], index: 5, kind: input, shape index: {}]
  %s6 = inlined_call_operand.vmem [shape: bf16[16,32], index: 6, kind: output, shape index: {}]
  %s7 = sld [smem:[#allocation0]]
  $region42: #{text_encoder_forward.16} parent=0
    _
  %s9 = ssub.s32 1, %s7
  %s10 = scalar_select 0, %s9, %s7
  // Predicated region
  $region2: #{text_encoder_forward.16} parent=0 // pred_check
    _
  $region3: #{text_encoder_forward.16} parent=0 // pred_check_branch
    %12 = sbr.rel (0) target = $region5
  $region4: #{text_encoder_forward.16} parent=0 // pred_region
    _
  $region5: #{text_encoder_forward.16} parent=0 // pred_fallthru
    _
  // Predicated region
  $region6: #{text_encoder_forward.16} parent=0 // pred_check
    _
  $region7: #{text_encoder_forward.16} parent=0 // pred_check_branch
    %14 = sbr.rel (0) target = $region9
  $region8: #{text_encoder_forward.16} parent=0 // pred_region
    _
  $region9: #{text_encoder_forward.16} parent=0 // pred_fallthru
    _
  // Predicated region
  $region10: #{text_encoder_forward.16} parent=0 // pred_check
    _
  $region11: #{text_encoder_forward.16} parent=0 // pred_check_branch
    %16 = sbr.rel (0) target = $region13
  $region12: #{text_encoder_forward.16} parent=0 // pred_region
    _
  $region13: #{text_encoder_forward.16} parent=0 // pred_fallthru
    _
  // Predicated region
  $region14: #{text_encoder_forward.16} parent=0 // pred_check
    _
  $region15: #{text_encoder_forward.16} parent=0 // pred_check_branch
    %18 = sbr.rel (0) target = $region17
  $region16: #{text_encoder_forward.16} parent=0 // pred_region
    _
  $region17: #{text_encoder_forward.16} parent=0 // pred_fallthru
    _
  // Predicated region
  $region18: #{text_encoder_forward.16} parent=0 // pred_check
    _
  $region19: #{text_encoder_forward.16} parent=0 // pred_check_branch
    %20 = sbr.rel (0) target = $region21
  $region20: #{text_encoder_forward.16} parent=0 // pred_region
    _
  $region21: #{text_encoder_forward.16} parent=0 // pred_fallthru
    _
  // Predicated region
  $region22: #{text_encoder_forward.16} parent=0 // pred_check
    _
  $region23: #{text_encoder_forward.16} parent=0 // pred_check_branch
    %22 = sbr.rel (0) target = $region25
  $region24: #{text_encoder_forward.16} parent=0 // pred_region
    _
  $region25: #{text_encoder_forward.16} parent=0 // pred_fallthru
    _
  %p24 = scmp.eq.s32.totalorder 0, 0
  // Predicated region
  $region26: #{text_encoder_forward.16} parent=0 // pred_check
    %p25 = pneg %p24
  $region27: #{text_encoder_forward.16} parent=0 // pred_check_branch
    %27 = sbr.rel (%p25) target = $region29
  $region28: #{text_encoder_forward.16} parent=0 // pred_region
    %vm28 = vcmask 261120
    %29 = vst.msk [vmem:[#allocation2] sm:$0xff] %vm28, 0.0
    %30 = vst.msk [vmem:[#allocation2 + $0x8] sm:$0xff] %vm28, 0.0
  $region29: #{text_encoder_forward.16} parent=0 // pred_fallthru
    _
  %v31 = vld [vmem:[#allocation2] sm:$0xff]
  %v32 = vld [vmem:[#allocation2 + $0x8] sm:$0xff]
  %v33 = vld [vmem:[%s0] sm:$0xf]
  %v34 = vld [vmem:[%s0 + $0x4] sm:$0xf]
  %v35 = vld [vmem:[%s1] sm:$0xf]
  %v36 = vld [vmem:[%s1 + $0x4] sm:$0xf]
  %v37 = vld [vmem:[%s1 + $0x8] sm:$0xf]
  %v38 = vld [vmem:[%s1 + $0xc] sm:$0xf]
  %v39 = vld [vmem:[%s1 + $0x10] sm:$0xf]
  %v40 = vld [vmem:[%s1 + $0x14] sm:$0xf]
  %v41 = vld [vmem:[%s1 + $0x18] sm:$0xf]
  %v42 = vld [vmem:[%s1 + $0x1c] sm:$0xf]
  %v45 = vunpack.c.l.b16 %v33
  %v46 = vunpack.c.l.b16 %v34
  %v47 = vpack.c.b16 %v46, %v45
  %v56 = vunpack.c.l.b16 %v35
  %v57 = vunpack.c.l.b16 %v36
  %v58 = vunpack.c.l.b16 %v37
  %v59 = vunpack.c.l.b16 %v38
  %v60 = vunpack.c.l.b16 %v39
  %v61 = vunpack.c.l.b16 %v40
  %v62 = vunpack.c.l.b16 %v41
  %v63 = vunpack.c.l.b16 %v42
  %v64 = vpack.c.b16 %v57, %v56
  %v65 = vpack.c.b16 %v59, %v58
  %v66 = vpack.c.b16 %v61, %v60
  %v67 = vpack.c.b16 %v63, %v62
  %vm72 = vcmask 523264
  %v74 = vsel %vm72, %v47, 0
  %76 = vmatprep.subr.bf16.mxu0 0
  %77 = vmatpush1.bf16.msra.mxu0 %v64
  %78 = vmatprep.subr.bf16.mxu0 0
  %79 = vmatpush1.bf16.msra.mxu0 %v65
  %80 = vmatprep.subr.bf16.mxu0 0
  %81 = vmatpush1.bf16.msra.mxu0 %v66
  %82 = vmatprep.subr.bf16.mxu0 0
  %83 = vmatpush1.bf16.msra.mxu0 %v67
  %84 = vmatprep.subr.bf16.mxu0 0
  %85 = vmatpush1.bf16.msra.mxu0 0
  %86 = vmatprep.subr.bf16.mxu0 0
  %87 = vmatpush1.bf16.msra.mxu0 0
  %88 = vmatprep.subr.bf16.mxu0 0
  %89 = vmatpush1.bf16.msra.mxu0 0
  %90 = vmatprep.subr.bf16.mxu0 0
  %91 = vmatpush1.bf16.msra.mxu0 0
  %92 = vmatprep.subr.bf16.mxu0 0
  %93 = vmatpush1.bf16.msra.mxu0 0
  %94 = vmatprep.subr.bf16.mxu0 0
  %95 = vmatpush1.bf16.msra.mxu0 0
  %96 = vmatprep.subr.bf16.mxu0 0
  %97 = vmatpush1.bf16.msra.mxu0 0
  %98 = vmatprep.subr.bf16.mxu0 0
  %99 = vmatpush1.bf16.msra.mxu0 0
  %100 = vmatprep.subr.bf16.mxu0 0
  %101 = vmatpush1.bf16.msra.mxu0 0
  %102 = vmatprep.subr.bf16.mxu0 0
  %103 = vmatpush1.bf16.msra.mxu0 0
  %104 = vmatprep.subr.bf16.mxu0 0
  %105 = vmatpush1.bf16.msra.mxu0 0
  %106 = vmatprep.subr.bf16.mxu0 0
  %107 = vmatpush1.bf16.msra.mxu0 0
  %108 = vmatprep.mubr.bf16.mxu0 0
  %109 = vmatmul.mubr.bf16.gmra.mrb[0].mxu0 %v74
  %v110 = vpop.f32.mrb[0].mxu0
  %v111 = vadd.f32 0.0, %v110
  %v112 = vpop.f32.mrb[0].mxu0
  %v113 = vpop.f32.mrb[0].mxu0
  %v114 = vadd.f32 0.0, %v113
  %v115 = vpop.f32.mrb[0].mxu0
  %116 = vdwg.mxu0
  %v117 = vadd.f32 %v31, %v111
  %v118 = vadd.f32 %v32, %v114
  %vm119 = vcmask 261120
  %120 = vst.msk [vmem:[#allocation2] sm:$0xff] %vm119, %v117
  %121 = vst.msk [vmem:[#allocation2 + $0x8] sm:$0xff] %vm119, %v118
  // Predicated region
  $region30: #{text_encoder_forward.16} parent=0 // pred_check
    %p122 = pneg %p24
  $region31: #{text_encoder_forward.16} parent=0 // pred_check_branch
    %124 = sbr.rel (%p122) target = $region33
  $region32: #{text_encoder_forward.16} parent=0 // pred_region
    %v125 = vld [vmem:[#allocation2] sm:$0xff]
    %v126 = vld [vmem:[#allocation2 + $0x8] sm:$0xff]
    %v127 = vld [vmem:[%s2] sm:$0x1]
    %v129 = vlaneseq
    %v130 = vshrl.u32 %v129, 7
    %v131 = vsub.s32 0, %v130
    %v132 = vrot.slane %v127, %v131
    %v134 = vadd.f32 %v125, %v132
    %v135 = vadd.f32 %v126, %v132
    %v136 = vld [vmem:[%s3] sm:$0xf]
    %v137 = vld [vmem:[%s3 + $0x4] sm:$0xf]
    %v138 = vunpack.c.l.bf16 %v136
    %v139 = vunpack.c.l.bf16 %v137
    %v140 = vadd.f32 %v134, %v138
    %v141 = vadd.f32 %v135, %v139
    %v142 = vsel %vm119, %v140, 0.0
    %143 = vadd.xlane.f32.xlu0 %v142
    %v144 = vpop.xlane.xlu0 %143
    %v145 = vsel %vm119, %v141, 0.0
    %146 = vadd.xlane.f32.xlu0 %v145
    %v147 = vpop.xlane.xlu0 %146
    %v148 = vrcp.pop 32.0
    %v149 = vmul.f32 %v144, %v148
    %v150 = vmul.f32 %v147, %v148
    %v151 = vsub.f32 %v140, %v149
    %v152 = vsub.f32 %v141, %v150
    %v153 = vmul.f32 %v151, %v151
    %v154 = vmul.f32 %v152, %v152
    %v155 = vsel %vm119, %v153, 0.0
    %156 = vadd.xlane.f32.xlu0 %v155
    %v157 = vpop.xlane.xlu0 %156
    %v158 = vsel %vm119, %v154, 0.0
    %159 = vadd.xlane.f32.xlu0 %v158
    %v160 = vpop.xlane.xlu0 %159
    %v161 = vmul.f32 %v157, %v148
    %v162 = vmul.f32 %v160, %v148
    %v163 = vadd.f32 %v161, 1e-12
    %v164 = vadd.f32 %v162, 1e-12
    %v165 = vrsqrt.pop %v163
    %v166 = vrsqrt.pop %v164
    %v167 = vmul.f32 %v151, %v165
    %v168 = vmul.f32 %v152, %v166
    %v169 = vld [vmem:[%s4] sm:$0x1]
    %v171 = vlaneseq
    %v172 = vshrl.u32 %v171, 7
    %v173 = vsub.s32 0, %v172
    %v174 = vrot.slane %v169, %v173
    %v176 = vmul.f32 %v167, %v174
    %v177 = vmul.f32 %v168, %v174
    %v178 = vld [vmem:[%s5] sm:$0x1]
    %v180 = vlaneseq
    %v181 = vshrl.u32 %v180, 7
    %v182 = vsub.s32 0, %v181
    %v183 = vrot.slane %v178, %v182
    %v185 = vadd.f32 %v176, %v183
    %v186 = vadd.f32 %v177, %v183
    %v187 = vpack.c.bf16 %v186, %v185
    %v189 = vunpack.c.l.b16 %v187
    %v190 = vunpack.c.h.b16 %v187
    %v191 = vpack.c.b16 %v189, %v189
    %v192 = vpack.c.b16 %v190, %v190
    %vm195 = vcmask 257024
    %196 = vst.msk [vmem:[%s6] sm:$0xf] %vm195, %v191
    %197 = vst.msk [vmem:[%s6 + $0x4] sm:$0xf] %vm195, %v192
  $region33: #{text_encoder_forward.16} parent=0 // pred_fallthru
    _
  // Predicated region
  $region34: #{text_encoder_forward.16} parent=0 // pred_check
    _
  $region35: #{text_encoder_forward.16} parent=0 // pred_check_branch
    %199 = sbr.rel (0) target = $region37
  $region36: #{text_encoder_forward.16} parent=0 // pred_region
    _
  $region37: #{text_encoder_forward.16} parent=0 // pred_fallthru
    _
  // Predicated region
  $region38: #{text_encoder_forward.16} parent=0 // pred_check
    _
  $region39: #{text_encoder_forward.16} parent=0 // pred_check_branch
    %201 = sbr.rel (0) target = $region41
  $region40: #{text_encoder_forward.16} parent=0 // pred_region
    _
  $region41: #{text_encoder_forward.16} parent=0 // pred_fallthru
    _

</llo_original>
